<compile_context>
chip_gen: v7x
topology: tpu7x:2x2x1
jax: 0.10.0
libtpu: 0.0.40
codegen_flags: <defaults>
</compile_context>

<pallas_src>
import functools

import numpy as np
import jax
import jax.numpy as jnp
from jax.experimental import pallas as pl
from jax.experimental.pallas import tpu as pltpu


# -----------------------------------------------------------------------------
# VMEM limit: generation-aware (v5e/v6e: 128 MiB physical -> 96 MiB scoped;
# v7x: 64 MiB physical -> 48 MiB scoped).  Safe fallback if the query fails.
# -----------------------------------------------------------------------------
@functools.lru_cache()
def _pick_vmem_limit_bytes():
    try:
        cap = int(pltpu.get_tpu_info().vmem_capacity_bytes)
    except Exception:
        cap = 64 * 1024 * 1024
    return int(max(32 * 1024 * 1024, min(96 * 1024 * 1024, (cap * 3) // 4)))


# -----------------------------------------------------------------------------
# Fused per-flow-block kernel (ActNorm folded into InvConvNear -> Coupling/WN)
# Layout: channels on sublanes, (guard-band padded) time on lanes; one batch
# element per grid step.
# -----------------------------------------------------------------------------
def _flow_block_kernel(x_ref, mask_ref, wf_ref, bf_ref, sw_ref, sb_ref,
                       inw_ref, inb_ref, rsw_ref, rsb_ref, ew_ref, eb_ref,
                       z_ref, ld_ref,
                       *, n_layers, ksize, dilation_rate, hidden, c_half,
                       sigmoid_scale, mm_dtype):
    x = x_ref[...]                          # (C, Tp)  time on lanes, masked
    mask = mask_ref[...]                    # (1, Tp)
    tp = x.shape[1]

    # --- ActNorm folded into the InvConvNear channel mix (small f32 matmul) ---
    xc = (jnp.dot(wf_ref[...], x, preferred_element_type=jnp.float32)
          + bf_ref[...] * mask)
    x0 = xc[:c_half, :]
    x1 = xc[c_half:, :]
    # x0 passes through the coupling unchanged: store it now and drop it from
    # the live set for the rest of the kernel.
    z_ref[:c_half, :] = x0

    # --- Coupling: start 1x1 conv (bf16 operands, f32 accumulate) ---
    h = (jnp.dot(sw_ref[...], x0.astype(mm_dtype),
                 preferred_element_type=jnp.float32) + sb_ref[...]) * mask

    out_acc = jnp.zeros((hidden, tp), jnp.float32)
    for i in range(n_layers):
        d = dilation_rate ** i
        pad = (ksize * d - d) // 2
        # Dilated conv taps via lane rolls.  The time axis carries a zero guard
        # band >= max tap offset and h is always masked, so wrap-around only
        # touches zero/masked lanes -> no boundary select needed.
        taps = []
        for k in range(ksize):
            off = k * d - pad
            if off == 0:
                taps.append(h)
            else:
                taps.append(pltpu.roll(h, (-off) % tp, 1))   # tap[t] = h[t+off]
        h_stack = jnp.concatenate(taps, axis=0).astype(mm_dtype)   # (K*H, Tp)
        x_in = jnp.dot(inw_ref[i], h_stack,
                       preferred_element_type=jnp.float32) + inb_ref[i]
        # fused_add_tanh_sigmoid_multiply with g = 0 (gin_channels == 0)
        acts = jnp.tanh(x_in[:hidden, :]) * jax.nn.sigmoid(x_in[hidden:, :])
        rs = jnp.dot(rsw_ref[i], acts.astype(mm_dtype),
                     preferred_element_type=jnp.float32) + rsb_ref[i]
        if i < n_layers - 1:
            h = (h + rs[:hidden, :]) * mask
        out_acc = out_acc + rs[hidden:, :]
    wn_out = out_acc * mask

    # --- end 1x1 conv (kept f32: feeds exp(logs) and the log-det) ---
    out = (jnp.dot(ew_ref[...], wn_out, preferred_element_type=jnp.float32)
           + eb_ref[...])
    m = out[:c_half, :]
    logs = out[c_half:, :]
    if sigmoid_scale:
        logs = jnp.log(1e-6 + jax.nn.sigmoid(logs + 2.0))
    z_ref[c_half:, :] = (m + jnp.exp(logs) * x1) * mask

    # data-dependent coupling log-det for this batch element (lane-dense store)
    ld = jnp.sum(logs * mask)
    ld_ref[...] = jnp.broadcast_to(ld, ld_ref.shape).astype(jnp.float32)


def _rep_spec(shape):
    """Whole-array block, constant index across the batch grid (weights)."""
    zeros = (0,) * len(shape)
    return pl.BlockSpec(shape, lambda b, _z=zeros: _z)


def _flow_block(x, mask_p, kb, cfg, mm_dtype):
    B, C, Tp = x.shape
    H = cfg['hidden_channels']
    K = cfg['kernel_size']
    nl = cfg['n_layers']
    half = C // 2
    kernel = functools.partial(
        _flow_block_kernel, n_layers=nl, ksize=K,
        dilation_rate=cfg['dilation_rate'], hidden=H, c_half=half,
        sigmoid_scale=cfg['sigmoid_scale'], mm_dtype=mm_dtype)
    grid_spec = pltpu.PrefetchScalarGridSpec(
        num_scalar_prefetch=0,
        grid=(B,),
        in_specs=[
            pl.BlockSpec((None, C, Tp), lambda b: (b, 0, 0)),   # x
            pl.BlockSpec((None, 1, Tp), lambda b: (b, 0, 0)),   # mask
            _rep_spec((C, C)),                                  # folded channel mix
            _rep_spec((C, 1)),                                  # folded bias
            _rep_spec((H, half)),                               # start_w (mm)
            _rep_spec((H, 1)),                                  # start_b
            _rep_spec((nl, 2 * H, K * H)),                      # in_w taps (mm)
            _rep_spec((nl, 2 * H, 1)),                          # in_b
            _rep_spec((nl, 2 * H, H)),                          # rs_w (mm)
            _rep_spec((nl, 2 * H, 1)),                          # rs_b
            _rep_spec((C, H)),                                  # end_w (f32)
            _rep_spec((C, 1)),                                  # end_b
        ],
        out_specs=[
            pl.BlockSpec((None, C, Tp), lambda b: (b, 0, 0)),
            pl.BlockSpec((None, 1, 128), lambda b: (b, 0, 0)),
        ],
    )
    z, ld = pl.pallas_call(
        kernel,
        out_shape=(jax.ShapeDtypeStruct((B, C, Tp), jnp.float32),
                   jax.ShapeDtypeStruct((B, 1, 128), jnp.float32)),
        grid_spec=grid_spec,
        compiler_params=pltpu.CompilerParams(
            dimension_semantics=("parallel",),
            vmem_limit_bytes=_pick_vmem_limit_bytes()),
    )(x, mask_p, kb['wfold'], kb['bfold'], kb['start_w'], kb['start_b'],
      kb['in_w'], kb['in_b'], kb['rs_w'], kb['rs_b'], kb['end_w'], kb['end_b'])
    return z, ld[:, 0, 0]


# -----------------------------------------------------------------------------
# Plain-JAX glue (squeeze / unsqueeze)
# -----------------------------------------------------------------------------
def squeeze(x, x_mask, n_sqz):
    b, c, t = x.shape
    t = (t // n_sqz) * n_sqz
    x = x[:, :, :t]
    x_sqz = x.reshape(b, c, t // n_sqz, n_sqz)
    x_sqz = jnp.transpose(x_sqz, (0, 3, 1, 2)).reshape(b, c * n_sqz, t // n_sqz)
    if x_mask is not None:
        x_mask = x_mask[:, :, n_sqz - 1::n_sqz]
    else:
        x_mask = jnp.ones((b, 1, t // n_sqz), x.dtype)
    return x_sqz * x_mask, x_mask


def unsqueeze(x, x_mask, n_sqz):
    b, c, t = x.shape
    x_unsqz = x.reshape(b, n_sqz, c // n_sqz, t)
    x_unsqz = jnp.transpose(x_unsqz, (0, 2, 3, 1)).reshape(b, c // n_sqz, t * n_sqz)
    if x_mask is not None:
        x_mask = jnp.repeat(x_mask[..., None], n_sqz, axis=-1).reshape(b, 1, t * n_sqz)
    else:
        x_mask = jnp.ones((b, 1, t * n_sqz), x.dtype)
    return x_unsqz * x_mask, x_mask


def _build_invconv_full(weight, C, n_split, n_sqz):
    """Fold InvConvNear's (permute -> blockwise n_split x n_split conv -> permute)
    into a single dense (C, C) channel-mixing matrix."""
    w = np.asarray(weight, np.float32)
    cg = C // n_split                # channels per split-group
    jn = n_split // n_sqz
    c_ids = np.arange(C)
    s = c_ids // (cg * jn)
    rem = c_ids % (cg * jn)
    g = rem // jn
    j = rem % jn
    split = s * jn + j
    same_group = (g[:, None] == g[None, :]).astype(np.float32)
    return w[split[:, None], split[None, :]] * same_group


# -----------------------------------------------------------------------------
# One-time kernel-parameter preparation (hoisted out of the forward path):
# ActNorm folded into the channel mix, tap-stacked in_w, bf16 weight casts,
# parameter-only log-det constants.
# -----------------------------------------------------------------------------
def prepare_glow_kernel_params(params, cfg, mm_dtype=jnp.bfloat16):
    C = cfg['in_channels'] * cfg['n_sqz']
    nl, H, K = cfg['n_layers'], cfg['hidden_channels'], cfg['kernel_size']
    kblocks = []
    for blk in params['blocks']:
        wfull = jnp.asarray(
            _build_invconv_full(blk['ic_w'], C, cfg['n_split'], cfg['n_sqz']),
            jnp.float32)
        scale = jnp.exp(blk['an_logs'])[:, 0][None, :]          # (1, C)
        wfold = (wfull * scale).astype(jnp.float32)             # W' = W * exp(logs)^T
        bfold = jnp.dot(wfull, blk['an_bias']).astype(jnp.float32)   # b' = W @ bias
        inw_st = jnp.transpose(blk['in_w'], (0, 2, 1, 3)).reshape(nl, 2 * H, K * H)
        kblocks.append(dict(
            wfold=wfold,
            bfold=bfold,
            start_w=blk['start_w'].astype(mm_dtype),
            start_b=blk['start_b'].astype(jnp.float32),
            in_w=inw_st.astype(mm_dtype),
            in_b=blk['in_b'].astype(jnp.float32),
            rs_w=blk['rs_w'].astype(mm_dtype),
            rs_b=blk['rs_b'].astype(jnp.float32),
            end_w=blk['end_w'].astype(jnp.float32),   # kept f32 (feeds exp/logdet)
            end_b=blk['end_b'].astype(jnp.float32),
            ld_const=(jnp.sum(blk['an_logs'])
                      + blk['ic_sls'][0, 0] * (C / cfg['n_split'])),
        ))
    return {'blocks': kblocks, 'mm_dtype': mm_dtype}


def glow_forward(x, x_mask, kparams, cfg):
    n_sqz = cfg['n_sqz']
    K, dr, nl = cfg['kernel_size'], cfg['dilation_rate'], cfg['n_layers']
    x, x_mask = squeeze(x, x_mask, n_sqz)
    B, C, T = x.shape
    x_len = jnp.sum(x_mask, axis=(1, 2))                     # (B,) true lengths

    # Lane-dense time padding with a zero guard band >= the largest dilated-tap
    # offset so in-kernel pltpu.roll wrap-around only touches zero lanes.
    max_off = (K - 1) * dr ** (nl - 1)
    Tp = ((T + max_off + 127) // 128) * 128
    xp = jnp.pad(x, ((0, 0), (0, 0), (0, Tp - T)))
    mask_p = jnp.pad(x_mask, ((0, 0), (0, 0), (0, Tp - T)))

    mm_dtype = kparams['mm_dtype']
    logdet_tot = jnp.zeros((B,), jnp.float32)
    for kb in kparams['blocks']:
        # parameter-only log-det terms (ActNorm + InvConvNear), precomputed
        logdet_tot = logdet_tot + kb['ld_const'] * x_len
        xp, ld = _flow_block(xp, mask_p, kb, cfg, mm_dtype)
        logdet_tot = logdet_tot + ld
    x = xp[:, :, :T]
    x, x_mask = unsqueeze(x, x_mask, n_sqz)
    return x, logdet_tot


# -----------------------------------------------------------------------------
# Deterministic parameter construction
# -----------------------------------------------------------------------------
def _plu(a):
    """Partial-pivot LU: returns (p, l, u) with a = p @ l @ u (scipy convention)."""
    a = np.asarray(a, np.float64)
    n = a.shape[0]
    U = a.copy()
    L = np.zeros((n, n))
    P = np.eye(n)
    for k in range(n):
        piv = k + int(np.argmax(np.abs(U[k:, k])))
        if piv != k:
            U[[k, piv], :] = U[[piv, k], :]
            P[[k, piv], :] = P[[piv, k], :]
            L[[k, piv], :] = L[[piv, k], :]
        for i in range(k + 1, n):
            L[i, k] = U[i, k] / U[k, k]
            U[i, :] = U[i, :] - L[i, k] * U[k, :]
    L = L + np.eye(n)
    return P.T, L, U   # P @ a = L @ U  =>  a = P.T @ L @ U


def init_glow_params(key, cfg):
    C = cfg['in_channels'] * cfg['n_sqz']
    H = cfg['hidden_channels']
    K = cfg['kernel_size']
    nl = cfg['n_layers']
    S = cfg['n_split']
    half = C // 2
    blocks = []
    for _ in range(cfg['n_blocks']):
        key, *ks = jax.random.split(key, 12)
        blk = {}
        # ActNorm (reference zero-inits; small deterministic values exercise the math).
        blk['an_logs'] = 0.1 * jax.random.normal(ks[0], (C, 1), jnp.float32)
        blk['an_bias'] = 0.1 * jax.random.normal(ks[1], (C, 1), jnp.float32)
        # InvConvNear: QR init + LU parameterisation, recomposed like _get_weight().
        w0 = np.asarray(jax.random.normal(ks[2], (S, S), jnp.float32), np.float64)
        q, _ = np.linalg.qr(w0)
        if np.linalg.det(q) < 0:
            q[:, 0] = -q[:, 0]
        p, l, u = _plu(q)
        s = np.diag(u)
        sign_s, log_s = np.sign(s), np.log(np.abs(s))
        u_strict = np.triu(u, 1)
        l_mask = np.tril(np.ones((S, S)), -1)
        eye = np.eye(S)
        weight = p @ (l * l_mask + eye) @ (u_strict * l_mask.T
                                           + np.diag(sign_s * np.exp(log_s)))
        blk['ic_w'] = jnp.asarray(weight, jnp.float32)
        blk['ic_sls'] = jnp.asarray(np.sum(log_s), jnp.float32).reshape(1, 1)
        # CouplingBlock (weight_norm at init is identity, so plain weights suffice).
        blk['start_w'] = 0.3 * jax.random.normal(ks[3], (H, half), jnp.float32)
        blk['start_b'] = 0.1 * jax.random.normal(ks[4], (H, 1), jnp.float32)
        blk['in_w'] = 0.3 * jax.random.normal(ks[5], (nl, K, 2 * H, H), jnp.float32)
        blk['in_b'] = 0.1 * jax.random.normal(ks[6], (nl, 2 * H, 1), jnp.float32)
        rs_w = 0.3 * jax.random.normal(ks[7], (nl, 2 * H, H), jnp.float32)
        rs_b = 0.1 * jax.random.normal(ks[8], (nl, 2 * H, 1), jnp.float32)
        # Last WN layer's res_skip conv only has `hidden` (skip) output channels;
        # zero the residual half so all layers stack uniformly.
        rs_w = rs_w.at[nl - 1, :H, :].set(0.0)
        rs_b = rs_b.at[nl - 1, :H, :].set(0.0)
        blk['rs_w'], blk['rs_b'] = rs_w, rs_b
        # end conv is zero-init in the reference; small values make the coupling
        # non-trivial (forward equations are unchanged).
        blk['end_w'] = 0.05 * jax.random.normal(ks[9], (C, H), jnp.float32)
        blk['end_b'] = 0.05 * jax.random.normal(ks[10], (C, 1), jnp.float32)
        blocks.append(blk)
    return {'blocks': blocks}


# -----------------------------------------------------------------------------
# Pure-JAX f32 reference (mirrors the PyTorch math) for validation
# -----------------------------------------------------------------------------
def _ref_conv1d(x, w, b, dilation=1, padding=0):
    y = jax.lax.conv_general_dilated(
        x, w, window_strides=(1,), padding=[(padding, padding)],
        rhs_dilation=(dilation,), dimension_numbers=('NCH', 'OIH', 'NCH'))
    return y + b[None, :, None]


def ref_glow_forward(x, x_mask, params, cfg):
    n_sqz, n_split = cfg['n_sqz'], cfg['n_split']
    H, K = cfg['hidden_channels'], cfg['kernel_size']
    x, x_mask = squeeze(x, x_mask, n_sqz)
    B, C, T = x.shape
    x_len = jnp.sum(x_mask, axis=(1, 2))
    logdet_tot = jnp.zeros((B,), jnp.float32)
    for blk in params['blocks']:
        # ActNorm
        x = (blk['an_bias'][None] + jnp.exp(blk['an_logs'][None]) * x) * x_mask
        logdet_tot = logdet_tot + jnp.sum(blk['an_logs']) * x_len
        # InvConvNear
        Cns = C // n_split
        x4 = x.reshape(B, n_sqz, Cns, n_split // n_sqz, T)
        x4 = jnp.transpose(x4, (0, 1, 3, 2, 4)).reshape(B, n_split, Cns, T)
        z4 = jnp.einsum('ik,bkct->bict', blk['ic_w'], x4)
        z5 = z4.reshape(B, n_sqz, n_split // n_sqz, Cns, T)
        x = jnp.transpose(z5, (0, 1, 3, 2, 4)).reshape(B, C, T) * x_mask
        logdet_tot = logdet_tot + blk['ic_sls'][0, 0] * (C / n_split) * x_len
        # CouplingBlock
        half = C // 2
        x0, x1 = x[:, :half], x[:, half:]
        h = _ref_conv1d(x0, blk['start_w'][..., None], blk['start_b'][:, 0]) * x_mask
        out = jnp.zeros((B, H, T), jnp.float32)
        for i in range(cfg['n_layers']):
            d = cfg['dilation_rate'] ** i
            pad = (K * d - d) // 2
            w_i = jnp.transpose(blk['in_w'][i], (1, 2, 0))   # (2H, H, K)
            x_in = _ref_conv1d(h, w_i, blk['in_b'][i, :, 0], dilation=d, padding=pad)
            acts = jnp.tanh(x_in[:, :H]) * jax.nn.sigmoid(x_in[:, H:])
            rs = _ref_conv1d(acts, blk['rs_w'][i][..., None], blk['rs_b'][i, :, 0])
            if i < cfg['n_layers'] - 1:
                h = (h + rs[:, :H]) * x_mask
            out = out + rs[:, H:]
        wn_out = out * x_mask
        o = _ref_conv1d(wn_out, blk['end_w'][..., None], blk['end_b'][:, 0])
        m, logs_c = o[:, :half], o[:, half:]
        x = jnp.concatenate([x0, (m + jnp.exp(logs_c) * x1) * x_mask], axis=1)
        logdet_tot = logdet_tot + jnp.sum(logs_c * x_mask, axis=(1, 2))
    x, x_mask = unsqueeze(x, x_mask, n_sqz)
    return x, logdet_tot


# -----------------------------------------------------------------------------
if __name__ == "__main__":
    cfg = dict(in_channels=4, hidden_channels=16, kernel_size=3, dilation_rate=2,
               n_blocks=2, n_layers=2, n_split=4, n_sqz=2, sigmoid_scale=False)
    B, T = 2, 16

    key = jax.random.PRNGKey(0)
    kx, kp = jax.random.split(key)
    x = jax.random.normal(kx, (B, cfg['in_channels'], T), jnp.float32)
    lengths = jnp.array([16, 12], jnp.float32)
    x_mask = (jnp.arange(T, dtype=jnp.float32)[None, None, :]
              < lengths[:, None, None]).astype(jnp.float32)

    params = init_glow_params(kp, cfg)
    z_ref, logdet_ref = ref_glow_forward(x, x_mask, params, cfg)

    # 1) Exactness check: f32 MXU path must match the PyTorch-mirroring f32
    #    reference tightly (semantics preserved).
    kparams_f32 = prepare_glow_kernel_params(params, cfg, mm_dtype=jnp.float32)
    z32, ld32 = jax.block_until_ready(glow_forward(x, x_mask, kparams_f32, cfg))
    np.testing.assert_allclose(np.asarray(z32), np.asarray(z_ref),
                               rtol=2e-4, atol=2e-4)
    np.testing.assert_allclose(np.asarray(ld32), np.asarray(logdet_ref),
                               rtol=2e-4, atol=2e-4)

    # 2) Production fast path: bf16 MXU operands (f32 accumulation), checked at
    #    bf16-appropriate tolerances against the same f32 reference.
    kparams_bf16 = prepare_glow_kernel_params(params, cfg, mm_dtype=jnp.bfloat16)
    zb, ldb = jax.block_until_ready(glow_forward(x, x_mask, kparams_bf16, cfg))
    np.testing.assert_allclose(np.asarray(zb), np.asarray(z_ref),
                               rtol=5e-2, atol=5e-2)
    np.testing.assert_allclose(np.asarray(ldb), np.asarray(logdet_ref),
                               rtol=5e-2, atol=5e-1)

    print("KERNEL_OK")
</pallas_src>

<mosaic_0001>
module attributes {stable_mosaic.version = 11 : i64} {
  func.func @_flow_block_kernel(%arg0: i32, %arg1: memref<1x8x128xf32, #tpu.memory_space<vmem>>, %arg2: memref<1x1x128xf32, #tpu.memory_space<vmem>>, %arg3: memref<8x8xf32, #tpu.memory_space<vmem>>, %arg4: memref<8x1xf32, #tpu.memory_space<vmem>>, %arg5: memref<16x4xf32, #tpu.memory_space<vmem>>, %arg6: memref<16x1xf32, #tpu.memory_space<vmem>>, %arg7: memref<2x32x48xf32, #tpu.memory_space<vmem>>, %arg8: memref<2x32x1xf32, #tpu.memory_space<vmem>>, %arg9: memref<2x32x16xf32, #tpu.memory_space<vmem>>, %arg10: memref<2x32x1xf32, #tpu.memory_space<vmem>>, %arg11: memref<8x16xf32, #tpu.memory_space<vmem>>, %arg12: memref<8x1xf32, #tpu.memory_space<vmem>>, %arg13: memref<1x8x128xf32, #tpu.memory_space<vmem>>, %arg14: memref<1x1x128xf32, #tpu.memory_space<vmem>>) attributes {dimension_semantics = [#tpu.dimension_semantics<parallel>], iteration_bounds = array<i64: 2>, scalar_prefetch = 0 : i64, scratch_operands = 0 : i64, tpu.core_type = #tpu.core_type<tc>, window_params = [{transform_indices = @transform_0, window_bounds = array<i64: 1, 8, 128>}, {transform_indices = @transform_1, window_bounds = array<i64: 1, 1, 128>}, {pipeline_mode = #tpu.pipeline_mode<synchronous>, transform_indices = @transform_2, window_bounds = array<i64: 8, 8>}, {pipeline_mode = #tpu.pipeline_mode<synchronous>, transform_indices = @transform_3, window_bounds = array<i64: 8, 1>}, {pipeline_mode = #tpu.pipeline_mode<synchronous>, transform_indices = @transform_4, window_bounds = array<i64: 16, 4>}, {pipeline_mode = #tpu.pipeline_mode<synchronous>, transform_indices = @transform_5, window_bounds = array<i64: 16, 1>}, {pipeline_mode = #tpu.pipeline_mode<synchronous>, transform_indices = @transform_6, window_bounds = array<i64: 2, 32, 48>}, {pipeline_mode = #tpu.pipeline_mode<synchronous>, transform_indices = @transform_7, window_bounds = array<i64: 2, 32, 1>}, {pipeline_mode = #tpu.pipeline_mode<synchronous>, transform_indices = @transform_8, window_bounds = array<i64: 2, 32, 16>}, {pipeline_mode = #tpu.pipeline_mode<synchronous>, transform_indices = @transform_9, window_bounds = array<i64: 2, 32, 1>}, {pipeline_mode = #tpu.pipeline_mode<synchronous>, transform_indices = @transform_10, window_bounds = array<i64: 8, 16>}, {pipeline_mode = #tpu.pipeline_mode<synchronous>, transform_indices = @transform_11, window_bounds = array<i64: 8, 1>}, {transform_indices = @transform_12, window_bounds = array<i64: 1, 8, 128>}, {transform_indices = @transform_13, window_bounds = array<i64: 1, 1, 128>}]} {
    %c0 = arith.constant 0 : index
    %c0_0 = arith.constant 0 : index
    %c0_1 = arith.constant 0 : index
    %0 = vector.load %arg1[%c0, %c0_0, %c0_1] : memref<1x8x128xf32, #tpu.memory_space<vmem>>, vector<1x8x128xf32>
    %1 = vector.shape_cast %0 : vector<1x8x128xf32> to vector<8x128xf32>
    %c0_2 = arith.constant 0 : index
    %c0_3 = arith.constant 0 : index
    %c0_4 = arith.constant 0 : index
    %2 = vector.load %arg2[%c0_2, %c0_3, %c0_4] : memref<1x1x128xf32, #tpu.memory_space<vmem>>, vector<1x1x128xf32>
    %3 = vector.shape_cast %2 : vector<1x1x128xf32> to vector<1x128xf32>
    %c0_5 = arith.constant 0 : index
    %c0_6 = arith.constant 0 : index
    %4 = vector.load %arg3[%c0_5, %c0_6] : memref<8x8xf32, #tpu.memory_space<vmem>>, vector<8x8xf32>
    %cst = arith.constant dense<0.000000e+00> : vector<8x128xf32>
    %5 = tpu.matmul %4, %1, %cst {dimension_numbers = #tpu.dot_dimension_numbers<[1], [0], [0], [1], [0, 0, 1, 1], [], []>} : vector<8x8xf32>, vector<8x128xf32>, vector<8x128xf32> -> vector<8x128xf32>
    %c0_7 = arith.constant 0 : index
    %c0_8 = arith.constant 0 : index
    %6 = vector.load %arg4[%c0_7, %c0_8] : memref<8x1xf32, #tpu.memory_space<vmem>>, vector<8x1xf32>
    %7 = vector.broadcast %6 : vector<8x1xf32> to vector<8x128xf32>
    %8 = vector.broadcast %3 : vector<1x128xf32> to vector<8x128xf32>
    %9 = arith.mulf %7, %8 : vector<8x128xf32>
    %10 = arith.addf %5, %9 : vector<8x128xf32>
    %11 = vector.extract_strided_slice %10 {offsets = [0, 0], sizes = [4, 128], strides = [1, 1]} : vector<8x128xf32> to vector<4x128xf32>
    %12 = vector.extract_strided_slice %10 {offsets = [4, 0], sizes = [4, 128], strides = [1, 1]} : vector<8x128xf32> to vector<4x128xf32>
    %c0_9 = arith.constant 0 : index
    %c0_10 = arith.constant 0 : index
    %c0_11 = arith.constant 0 : index
    %13 = vector.load %arg13[%c0_9, %c0_10, %c0_11] : memref<1x8x128xf32, #tpu.memory_space<vmem>>, vector<1x4x128xf32>
    %14 = vector.shape_cast %13 : vector<1x4x128xf32> to vector<4x128xf32>
    %15 = vector.shape_cast %11 : vector<4x128xf32> to vector<1x4x128xf32>
    tpu.vector_store %arg13[%c0_9, %c0_10, %c0_11], %15 {strides = array<i32>} : memref<1x8x128xf32, #tpu.memory_space<vmem>>, vector<1x4x128xf32>,
    %c0_12 = arith.constant 0 : index
    %c0_13 = arith.constant 0 : index
    %16 = vector.load %arg5[%c0_12, %c0_13] : memref<16x4xf32, #tpu.memory_space<vmem>>, vector<16x4xf32>
    %cst_14 = arith.constant dense<0.000000e+00> : vector<16x128xf32>
    %17 = tpu.matmul %16, %11, %cst_14 {dimension_numbers = #tpu.dot_dimension_numbers<[1], [0], [0], [1], [0, 0, 1, 1], [], []>} : vector<16x4xf32>, vector<4x128xf32>, vector<16x128xf32> -> vector<16x128xf32>
    %c0_15 = arith.constant 0 : index
    %c0_16 = arith.constant 0 : index
    %18 = vector.load %arg6[%c0_15, %c0_16] : memref<16x1xf32, #tpu.memory_space<vmem>>, vector<16x1xf32>
    %19 = vector.broadcast %18 : vector<16x1xf32> to vector<16x128xf32>
    %20 = arith.addf %17, %19 : vector<16x128xf32>
    %21 = vector.broadcast %3 : vector<1x128xf32> to vector<16x128xf32>
    %22 = arith.mulf %20, %21 : vector<16x128xf32>
    %cst_17 = arith.constant 0.000000e+00 : f32
    %23 = vector.broadcast %cst_17 : f32 to vector<16x128xf32>
    %c1_i32 = arith.constant 1 : i32
    %24 = tpu.dynamic_rotate %22 by %c1_i32 dim 1 : vector<16x128xf32>, i32 -> vector<16x128xf32>
    %c127_i32 = arith.constant 127 : i32
    %25 = tpu.dynamic_rotate %22 by %c127_i32 dim 1 : vector<16x128xf32>, i32 -> vector<16x128xf32>
    %26 = tpu.concatenate %24, %22, %25 in 0 : vector<16x128xf32>, vector<16x128xf32>, vector<16x128xf32> -> vector<48x128xf32>
    %c0_18 = arith.constant 0 : index
    %c0_19 = arith.constant 0 : index
    %c0_20 = arith.constant 0 : index
    %27 = vector.load %arg7[%c0_18, %c0_19, %c0_20] : memref<2x32x48xf32, #tpu.memory_space<vmem>>, vector<1x32x48xf32>
    %28 = vector.shape_cast %27 : vector<1x32x48xf32> to vector<32x48xf32>
    %cst_21 = arith.constant dense<0.000000e+00> : vector<32x128xf32>
    %29 = tpu.matmul %28, %26, %cst_21 {dimension_numbers = #tpu.dot_dimension_numbers<[1], [0], [0], [1], [0, 0, 1, 1], [], []>} : vector<32x48xf32>, vector<48x128xf32>, vector<32x128xf32> -> vector<32x128xf32>
    %c0_22 = arith.constant 0 : index
    %c0_23 = arith.constant 0 : index
    %c0_24 = arith.constant 0 : index
    %30 = vector.load %arg8[%c0_22, %c0_23, %c0_24] : memref<2x32x1xf32, #tpu.memory_space<vmem>>, vector<1x32x1xf32>
    %31 = vector.shape_cast %30 : vector<1x32x1xf32> to vector<32x1xf32>
    %32 = vector.broadcast %31 : vector<32x1xf32> to vector<32x128xf32>
    %33 = arith.addf %29, %32 : vector<32x128xf32>
    %34 = vector.extract_strided_slice %33 {offsets = [0, 0], sizes = [16, 128], strides = [1, 1]} : vector<32x128xf32> to vector<16x128xf32>
    %35 = math.tanh %34 : vector<16x128xf32>
    %36 = vector.extract_strided_slice %33 {offsets = [16, 0], sizes = [16, 128], strides = [1, 1]} : vector<32x128xf32> to vector<16x128xf32>
    %37 = arith.negf %36 : vector<16x128xf32>
    %38 = math.exp %37 : vector<16x128xf32>
    %cst_25 = arith.constant 1.000000e+00 : f32
    %39 = vector.broadcast %cst_25 : f32 to vector<16x128xf32>
    %40 = arith.addf %39, %38 : vector<16x128xf32>
    %41 = arith.divf %39, %40 : vector<16x128xf32>
    %42 = arith.mulf %35, %41 : vector<16x128xf32>
    %c0_26 = arith.constant 0 : index
    %c0_27 = arith.constant 0 : index
    %c0_28 = arith.constant 0 : index
    %43 = vector.load %arg9[%c0_26, %c0_27, %c0_28] : memref<2x32x16xf32, #tpu.memory_space<vmem>>, vector<1x32x16xf32>
    %44 = vector.shape_cast %43 : vector<1x32x16xf32> to vector<32x16xf32>
    %cst_29 = arith.constant dense<0.000000e+00> : vector<32x128xf32>
    %45 = tpu.matmul %44, %42, %cst_29 {dimension_numbers = #tpu.dot_dimension_numbers<[1], [0], [0], [1], [0, 0, 1, 1], [], []>} : vector<32x16xf32>, vector<16x128xf32>, vector<32x128xf32> -> vector<32x128xf32>
    %c0_30 = arith.constant 0 : index
    %c0_31 = arith.constant 0 : index
    %c0_32 = arith.constant 0 : index
    %46 = vector.load %arg10[%c0_30, %c0_31, %c0_32] : memref<2x32x1xf32, #tpu.memory_space<vmem>>, vector<1x32x1xf32>
    %47 = vector.shape_cast %46 : vector<1x32x1xf32> to vector<32x1xf32>
    %48 = vector.broadcast %47 : vector<32x1xf32> to vector<32x128xf32>
    %49 = arith.addf %45, %48 : vector<32x128xf32>
    %50 = vector.extract_strided_slice %49 {offsets = [0, 0], sizes = [16, 128], strides = [1, 1]} : vector<32x128xf32> to vector<16x128xf32>
    %51 = arith.addf %22, %50 : vector<16x128xf32>
    %52 = vector.broadcast %3 : vector<1x128xf32> to vector<16x128xf32>
    %53 = arith.mulf %51, %52 : vector<16x128xf32>
    %54 = vector.extract_strided_slice %49 {offsets = [16, 0], sizes = [16, 128], strides = [1, 1]} : vector<32x128xf32> to vector<16x128xf32>
    %55 = arith.addf %23, %54 : vector<16x128xf32>
    %c2_i32 = arith.constant 2 : i32
    %56 = tpu.dynamic_rotate %53 by %c2_i32 dim 1 : vector<16x128xf32>, i32 -> vector<16x128xf32>
    %c126_i32 = arith.constant 126 : i32
    %57 = tpu.dynamic_rotate %53 by %c126_i32 dim 1 : vector<16x128xf32>, i32 -> vector<16x128xf32>
    %58 = tpu.concatenate %56, %53, %57 in 0 : vector<16x128xf32>, vector<16x128xf32>, vector<16x128xf32> -> vector<48x128xf32>
    %c1 = arith.constant 1 : index
    %c0_33 = arith.constant 0 : index
    %c0_34 = arith.constant 0 : index
    %59 = vector.load %arg7[%c1, %c0_33, %c0_34] : memref<2x32x48xf32, #tpu.memory_space<vmem>>, vector<1x32x48xf32>
    %60 = vector.shape_cast %59 : vector<1x32x48xf32> to vector<32x48xf32>
    %cst_35 = arith.constant dense<0.000000e+00> : vector<32x128xf32>
    %61 = tpu.matmul %60, %58, %cst_35 {dimension_numbers = #tpu.dot_dimension_numbers<[1], [0], [0], [1], [0, 0, 1, 1], [], []>} : vector<32x48xf32>, vector<48x128xf32>, vector<32x128xf32> -> vector<32x128xf32>
    %c1_36 = arith.constant 1 : index
    %c0_37 = arith.constant 0 : index
    %c0_38 = arith.constant 0 : index
    %62 = vector.load %arg8[%c1_36, %c0_37, %c0_38] : memref<2x32x1xf32, #tpu.memory_space<vmem>>, vector<1x32x1xf32>
    %63 = vector.shape_cast %62 : vector<1x32x1xf32> to vector<32x1xf32>
    %64 = vector.broadcast %63 : vector<32x1xf32> to vector<32x128xf32>
    %65 = arith.addf %61, %64 : vector<32x128xf32>
    %66 = vector.extract_strided_slice %65 {offsets = [0, 0], sizes = [16, 128], strides = [1, 1]} : vector<32x128xf32> to vector<16x128xf32>
    %67 = math.tanh %66 : vector<16x128xf32>
    %68 = vector.extract_strided_slice %65 {offsets = [16, 0], sizes = [16, 128], strides = [1, 1]} : vector<32x128xf32> to vector<16x128xf32>
    %69 = arith.negf %68 : vector<16x128xf32>
    %70 = math.exp %69 : vector<16x128xf32>
    %cst_39 = arith.constant 1.000000e+00 : f32
    %71 = vector.broadcast %cst_39 : f32 to vector<16x128xf32>
    %72 = arith.addf %71, %70 : vector<16x128xf32>
    %73 = arith.divf %71, %72 : vector<16x128xf32>
    %74 = arith.mulf %67, %73 : vector<16x128xf32>
    %c1_40 = arith.constant 1 : index
    %c0_41 = arith.constant 0 : index
    %c0_42 = arith.constant 0 : index
    %75 = vector.load %arg9[%c1_40, %c0_41, %c0_42] : memref<2x32x16xf32, #tpu.memory_space<vmem>>, vector<1x32x16xf32>
    %76 = vector.shape_cast %75 : vector<1x32x16xf32> to vector<32x16xf32>
    %cst_43 = arith.constant dense<0.000000e+00> : vector<32x128xf32>
    %77 = tpu.matmul %76, %74, %cst_43 {dimension_numbers = #tpu.dot_dimension_numbers<[1], [0], [0], [1], [0, 0, 1, 1], [], []>} : vector<32x16xf32>, vector<16x128xf32>, vector<32x128xf32> -> vector<32x128xf32>
    %c1_44 = arith.constant 1 : index
    %c0_45 = arith.constant 0 : index
    %c0_46 = arith.constant 0 : index
    %78 = vector.load %arg10[%c1_44, %c0_45, %c0_46] : memref<2x32x1xf32, #tpu.memory_space<vmem>>, vector<1x32x1xf32>
    %79 = vector.shape_cast %78 : vector<1x32x1xf32> to vector<32x1xf32>
    %80 = vector.broadcast %79 : vector<32x1xf32> to vector<32x128xf32>
    %81 = arith.addf %77, %80 : vector<32x128xf32>
    %82 = vector.extract_strided_slice %81 {offsets = [16, 0], sizes = [16, 128], strides = [1, 1]} : vector<32x128xf32> to vector<16x128xf32>
    %83 = arith.addf %55, %82 : vector<16x128xf32>
    %84 = vector.broadcast %3 : vector<1x128xf32> to vector<16x128xf32>
    %85 = arith.mulf %83, %84 : vector<16x128xf32>
    %c0_47 = arith.constant 0 : index
    %c0_48 = arith.constant 0 : index
    %86 = vector.load %arg11[%c0_47, %c0_48] : memref<8x16xf32, #tpu.memory_space<vmem>>, vector<8x16xf32>
    %cst_49 = arith.constant dense<0.000000e+00> : vector<8x128xf32>
    %87 = tpu.matmul %86, %85, %cst_49 {dimension_numbers = #tpu.dot_dimension_numbers<[1], [0], [0], [1], [0, 0, 1, 1], [], []>} : vector<8x16xf32>, vector<16x128xf32>, vector<8x128xf32> -> vector<8x128xf32>
    %c0_50 = arith.constant 0 : index
    %c0_51 = arith.constant 0 : index
    %88 = vector.load %arg12[%c0_50, %c0_51] : memref<8x1xf32, #tpu.memory_space<vmem>>, vector<8x1xf32>
    %89 = vector.broadcast %88 : vector<8x1xf32> to vector<8x128xf32>
    %90 = arith.addf %87, %89 : vector<8x128xf32>
    %91 = vector.extract_strided_slice %90 {offsets = [0, 0], sizes = [4, 128], strides = [1, 1]} : vector<8x128xf32> to vector<4x128xf32>
    %92 = vector.extract_strided_slice %90 {offsets = [4, 0], sizes = [4, 128], strides = [1, 1]} : vector<8x128xf32> to vector<4x128xf32>
    %93 = math.exp %92 : vector<4x128xf32>
    %94 = arith.mulf %93, %12 : vector<4x128xf32>
    %95 = arith.addf %91, %94 : vector<4x128xf32>
    %96 = vector.broadcast %3 : vector<1x128xf32> to vector<4x128xf32>
    %97 = arith.mulf %95, %96 : vector<4x128xf32>
    %c0_52 = arith.constant 0 : index
    %c4 = arith.constant 4 : index
    %c0_53 = arith.constant 0 : index
    %98 = vector.load %arg13[%c0_52, %c4, %c0_53] : memref<1x8x128xf32, #tpu.memory_space<vmem>>, vector<1x4x128xf32>
    %99 = vector.shape_cast %98 : vector<1x4x128xf32> to vector<4x128xf32>
    %100 = vector.shape_cast %97 : vector<4x128xf32> to vector<1x4x128xf32>
    tpu.vector_store %arg13[%c0_52, %c4, %c0_53], %100 {strides = array<i32>} : memref<1x8x128xf32, #tpu.memory_space<vmem>>, vector<1x4x128xf32>,
    %101 = vector.broadcast %3 : vector<1x128xf32> to vector<4x128xf32>
    %102 = arith.mulf %92, %101 : vector<4x128xf32>
    %103 = vector.shape_cast %102 : vector<4x128xf32> to vector<1x4x128xf32>
    %cst_54 = arith.constant dense<0.000000e+00> : vector<1xf32>
    %104 = vector.multi_reduction <add>, %103, %cst_54 [1, 2] : vector<1x4x128xf32> to vector<1xf32>
    %105 = vector.shape_cast %104 : vector<1xf32> to vector<1x1x1xf32>
    %106 = vector.extract %105[0, 0, 0] : f32 from vector<1x1x1xf32>
    %107 = vector.broadcast %106 : f32 to vector<1x128xf32>
    %c0_55 = arith.constant 0 : index
    %c0_56 = arith.constant 0 : index
    %c0_57 = arith.constant 0 : index
    %108 = vector.load %arg14[%c0_55, %c0_56, %c0_57] : memref<1x1x128xf32, #tpu.memory_space<vmem>>, vector<1x1x128xf32>
    %109 = vector.shape_cast %108 : vector<1x1x128xf32> to vector<1x128xf32>
    %110 = vector.shape_cast %107 : vector<1x128xf32> to vector<1x1x128xf32>
    tpu.vector_store %arg14[%c0_55, %c0_56, %c0_57], %110 {strides = array<i32>} : memref<1x1x128xf32, #tpu.memory_space<vmem>>, vector<1x1x128xf32>,
    return
  }
  func.func @transform_0(%arg0: i32) -> (i32, i32, i32) {
    %c0_i32 = arith.constant 0 : i32
    %c0_i32_0 = arith.constant 0 : i32
    %c0_i32_1 = arith.constant 0 : i32
    return %arg0, %c0_i32, %c0_i32_0 : i32, i32, i32
  }
  func.func @transform_1(%arg0: i32) -> (i32, i32, i32) {
    %c0_i32 = arith.constant 0 : i32
    %c0_i32_0 = arith.constant 0 : i32
    %c0_i32_1 = arith.constant 0 : i32
    return %arg0, %c0_i32, %c0_i32_0 : i32, i32, i32
  }
  func.func @transform_2(%arg0: i32) -> (i32, i32) {
    %c0_i32 = arith.constant 0 : i32
    %c0_i32_0 = arith.constant 0 : i32
    %c0_i32_1 = arith.constant 0 : i32
    return %c0_i32, %c0_i32_0 : i32, i32
  }
  func.func @transform_3(%arg0: i32) -> (i32, i32) {
    %c0_i32 = arith.constant 0 : i32
    %c0_i32_0 = arith.constant 0 : i32
    %c0_i32_1 = arith.constant 0 : i32
    return %c0_i32, %c0_i32_0 : i32, i32
  }
  func.func @transform_4(%arg0: i32) -> (i32, i32) {
    %c0_i32 = arith.constant 0 : i32
    %c0_i32_0 = arith.constant 0 : i32
    %c0_i32_1 = arith.constant 0 : i32
    return %c0_i32, %c0_i32_0 : i32, i32
  }
  func.func @transform_5(%arg0: i32) -> (i32, i32) {
    %c0_i32 = arith.constant 0 : i32
    %c0_i32_0 = arith.constant 0 : i32
    %c0_i32_1 = arith.constant 0 : i32
    return %c0_i32, %c0_i32_0 : i32, i32
  }
  func.func @transform_6(%arg0: i32) -> (i32, i32, i32) {
    %c0_i32 = arith.constant 0 : i32
    %c0_i32_0 = arith.constant 0 : i32
    %c0_i32_1 = arith.constant 0 : i32
    %c0_i32_2 = arith.constant 0 : i32
    return %c0_i32, %c0_i32_0, %c0_i32_1 : i32, i32, i32
  }
  func.func @transform_7(%arg0: i32) -> (i32, i32, i32) {
    %c0_i32 = arith.constant 0 : i32
    %c0_i32_0 = arith.constant 0 : i32
    %c0_i32_1 = arith.constant 0 : i32
    %c0_i32_2 = arith.constant 0 : i32
    return %c0_i32, %c0_i32_0, %c0_i32_1 : i32, i32, i32
  }
  func.func @transform_8(%arg0: i32) -> (i32, i32, i32) {
    %c0_i32 = arith.constant 0 : i32
    %c0_i32_0 = arith.constant 0 : i32
    %c0_i32_1 = arith.constant 0 : i32
    %c0_i32_2 = arith.constant 0 : i32
    return %c0_i32, %c0_i32_0, %c0_i32_1 : i32, i32, i32
  }
  func.func @transform_9(%arg0: i32) -> (i32, i32, i32) {
    %c0_i32 = arith.constant 0 : i32
    %c0_i32_0 = arith.constant 0 : i32
    %c0_i32_1 = arith.constant 0 : i32
    %c0_i32_2 = arith.constant 0 : i32
    return %c0_i32, %c0_i32_0, %c0_i32_1 : i32, i32, i32
  }
  func.func @transform_10(%arg0: i32) -> (i32, i32) {
    %c0_i32 = arith.constant 0 : i32
    %c0_i32_0 = arith.constant 0 : i32
    %c0_i32_1 = arith.constant 0 : i32
    return %c0_i32, %c0_i32_0 : i32, i32
  }
  func.func @transform_11(%arg0: i32) -> (i32, i32) {
    %c0_i32 = arith.constant 0 : i32
    %c0_i32_0 = arith.constant 0 : i32
    %c0_i32_1 = arith.constant 0 : i32
    return %c0_i32, %c0_i32_0 : i32, i32
  }
  func.func @transform_12(%arg0: i32) -> (i32, i32, i32) {
    %c0_i32 = arith.constant 0 : i32
    %c0_i32_0 = arith.constant 0 : i32
    %c0_i32_1 = arith.constant 0 : i32
    return %arg0, %c0_i32, %c0_i32_0 : i32, i32, i32
  }
  func.func @transform_13(%arg0: i32) -> (i32, i32, i32) {
    %c0_i32 = arith.constant 0 : i32
    %c0_i32_0 = arith.constant 0 : i32
    %c0_i32_1 = arith.constant 0 : i32
    return %arg0, %c0_i32, %c0_i32_0 : i32, i32, i32
  }
}

</mosaic_0001>

<llo_original>
// kernel: tpu_custom_call.1
$region0: #{tpu_custom_call.1}
  #allocation0 [shape = 'u32[]', space=smem, size = 0x4, offset = 0x4, fixed_abs, tag = 'smem constant byte address 0x4 - core index']
  #allocation1 [shape = 'u32[144,128]{1,0:T(1,128)}', space=vmem, size = 0x12000, scoped, tag = 'internal scratch']
  %s0 = inlined_call_operand.vmem [shape: f32[2,8,128], index: 0, kind: input, shape index: {}]
  %s1 = inlined_call_operand.vmem [shape: f32[2,1,128], index: 1, kind: input, shape index: {}]
  %s2 = inlined_call_operand.vmem [shape: f32[8,8], index: 2, kind: input, shape index: {}]
  %s3 = inlined_call_operand.vmem [shape: f32[8,1], index: 3, kind: input, shape index: {}]
  %s4 = inlined_call_operand.vmem [shape: f32[16,4], index: 4, kind: input, shape index: {}]
  %s5 = inlined_call_operand.vmem [shape: f32[16,1], index: 5, kind: input, shape index: {}]
  %s6 = inlined_call_operand.vmem [shape: f32[2,32,48], index: 6, kind: input, shape index: {}]
  %s7 = inlined_call_operand.vmem [shape: f32[2,32,1], index: 7, kind: input, shape index: {}]
  %s8 = inlined_call_operand.vmem [shape: f32[2,32,16], index: 8, kind: input, shape index: {}]
  %s9 = inlined_call_operand.vmem [shape: f32[2,32,1], index: 9, kind: input, shape index: {}]
  %s10 = inlined_call_operand.vmem [shape: f32[8,16], index: 10, kind: input, shape index: {}]
  %s11 = inlined_call_operand.vmem [shape: f32[8,1], index: 11, kind: input, shape index: {}]
  %s12 = inlined_call_operand.hbm [shape: f32[2,8,128], index: 12, kind: output, shape index: {0}]
  %s13 = inlined_call_operand.hbm [shape: f32[2,1,128], index: 13, kind: output, shape index: {1}]
  %14 = xla_tuple %s12, %s13
  %s15 = sld [smem:[#allocation0]]
  $region89: #{tpu_custom_call.1} parent=0
    _
  %s17 = ssub.s32 1, %s15
  %s18 = scalar_select 0, %s17, %s15
  $region1: #{tpu_custom_call.1} parent=0
    #allocation2 [shape = 'u8[8192]{0}', space=vmem, size = 0x2000, scoped, tag = 'output window, operand 0']
    #allocation3 [shape = 's32[2]{0}', space=sflag, size = 0x8, scoped, tag = 'scoped memory for tpu_custom_call.1']
    #allocation4 [shape = 'u8[1024]{0}', space=vmem, size = 0x400, scoped, tag = 'output window, operand 1']
    #allocation5 [shape = 's32[2]{0}', space=sflag, size = 0x8, scoped, tag = 'scoped memory for tpu_custom_call.1']
    %19 = vsyncpa [#allocation3], 0
    %s20 = scalar_lea.sflag [#allocation3], 1
    %21 = vsyncpa %s20, 0
    %22 = vsyncpa [#allocation5], 0
    %s23 = scalar_lea.sflag [#allocation5], 1
    %24 = vsyncpa %s23, 0
    loop: start=0, step=1, limit=4
    $region2: #{tpu_custom_call.1} parent=1 // loop_pre_header
      _
    $region3: #{tpu_custom_call.1} parent=1 // loop_header
      %s26 = sphi 0, %s30
      %p27 = scmp.ge.s32.totalorder %s26, 4
      %s36 = sphi 0, %s38
      %s39 = sphi 0, %s36
      %s40 = sphi 0, %s39
      %s56 = sphi 0, %s40
      %s62 = sphi 0, %s64
      %s65 = sphi 0, %s62
      %s66 = sphi 0, %s65
      %s82 = sphi 0, %s66
      %s86 = sphi 0, %s86
      %s88 = sphi 0, %s86
      %s89 = sphi 0, %s88
      %s103 = sphi 0, %s89
      %s107 = sphi 0, %s107
      %s109 = sphi 0, %s107
      %s110 = sphi 0, %s109
      %s124 = sphi 0, %s110
      %s128 = sphi 0, %s128
      %s130 = sphi 0, %s128
      %s131 = sphi 0, %s130
      %s145 = sphi 0, %s131
      %s149 = sphi 0, %s149
      %s151 = sphi 0, %s149
      %s152 = sphi 0, %s151
      %s166 = sphi 0, %s152
      %s170 = sphi 0, %s170
      %s172 = sphi 0, %s170
      %s173 = sphi 0, %s172
      %s187 = sphi 0, %s173
      %s191 = sphi 0, %s191
      %s193 = sphi 0, %s191
      %s194 = sphi 0, %s193
      %s208 = sphi 0, %s194
      %s212 = sphi 0, %s212
      %s214 = sphi 0, %s212
      %s215 = sphi 0, %s214
      %s229 = sphi 0, %s215
      %s233 = sphi 0, %s233
      %s235 = sphi 0, %s233
      %s236 = sphi 0, %s235
      %s250 = sphi 0, %s236
      %s254 = sphi 0, %s254
      %s256 = sphi 0, %s254
      %s257 = sphi 0, %s256
      %s271 = sphi 0, %s257
      %s275 = sphi 0, %s275
      %s277 = sphi 0, %s275
      %s278 = sphi 0, %s277
      %s292 = sphi 0, %s278
      %s298 = sphi 0, %s300
      %s301 = sphi 0, %s298
      %s302 = sphi 0, %s301
      %s318 = sphi 0, %s302
      %s324 = sphi 0, %s326
      %s327 = sphi 0, %s324
      %s328 = sphi 0, %s327
      %s344 = sphi 0, %s328
    $region4: #{tpu_custom_call.1} parent=1 // loop_header_branch
      %29 = sbr.rel (%p27) target = $region8
    $region5: #{tpu_custom_call.1} parent=1 // loop_body
      %s31 = ssub.s32 %s26, 1
      %s32 = ssub.s32 %s26, 2
      %s33 = sadd.s32 %s26, 1
      %s34 = ssub.s32 %s26, %s33
      %p35 = scmp.eq.s32.totalorder %s34, 0
      %s37 = sadd.s32 %s36, 1
      %s38 = scalar_select %p35, %s36, %s37
      %p41 = pneg %p35
      %p42 = scmp.eq.s32.totalorder %s26, 1
      %p43 = por %p41, %p42
      %p44 = scmp.ne.s32.totalorder %s36, %s39
      %p45 = scmp.eq.s32.totalorder %s26, 0
      %p46 = por %p44, %p45
      %p47 = scmp.ne.s32.totalorder %s36, %s39
      %p48 = scmp.eq.s32.totalorder %s31, 1
      %p49 = por %p47, %p48
      %p50 = scmp.ne.s32.totalorder %s39, %s40
      %p51 = scmp.eq.s32.totalorder %s31, 0
      %p52 = por %p50, %p51
      %p53 = scmp.ne.s32.totalorder %s39, %s40
      %p54 = scmp.eq.s32.totalorder %s32, 1
      %p55 = por %p53, %p54
      %p57 = scmp.ne.s32.totalorder %s40, %s56
      %p58 = scmp.eq.s32.totalorder %s32, 0
      %p59 = por %p57, %p58
      %s60 = ssub.s32 %s26, %s33
      %p61 = scmp.eq.s32.totalorder %s60, 0
      %s63 = sadd.s32 %s62, 1
      %s64 = scalar_select %p61, %s62, %s63
      %p67 = pneg %p61
      %p68 = scmp.eq.s32.totalorder %s26, 1
      %p69 = por %p67, %p68
      %p70 = scmp.ne.s32.totalorder %s62, %s65
      %p71 = scmp.eq.s32.totalorder %s26, 0
      %p72 = por %p70, %p71
      %p73 = scmp.ne.s32.totalorder %s62, %s65
      %p74 = scmp.eq.s32.totalorder %s31, 1
      %p75 = por %p73, %p74
      %p76 = scmp.ne.s32.totalorder %s65, %s66
      %p77 = scmp.eq.s32.totalorder %s31, 0
      %p78 = por %p76, %p77
      %p79 = scmp.ne.s32.totalorder %s65, %s66
      %p80 = scmp.eq.s32.totalorder %s32, 1
      %p81 = por %p79, %p80
      %p83 = scmp.ne.s32.totalorder %s66, %s82
      %p84 = scmp.eq.s32.totalorder %s32, 0
      %p85 = por %p83, %p84
      %s87 = sadd.s32 %s86, 1
      %p90 = scmp.eq.s32.totalorder %s26, 1
      %p91 = scmp.ne.s32.totalorder %s86, %s88
      %p92 = scmp.eq.s32.totalorder %s26, 0
      %p93 = por %p91, %p92
      %p94 = scmp.ne.s32.totalorder %s86, %s88
      %p95 = scmp.eq.s32.totalorder %s31, 1
      %p96 = por %p94, %p95
      %p97 = scmp.ne.s32.totalorder %s88, %s89
      %p98 = scmp.eq.s32.totalorder %s31, 0
      %p99 = por %p97, %p98
      %p100 = scmp.ne.s32.totalorder %s88, %s89
      %p101 = scmp.eq.s32.totalorder %s32, 1
      %p102 = por %p100, %p101
      %p104 = scmp.ne.s32.totalorder %s89, %s103
      %p105 = scmp.eq.s32.totalorder %s32, 0
      %p106 = por %p104, %p105
      %s108 = sadd.s32 %s107, 1
      %p111 = scmp.eq.s32.totalorder %s26, 1
      %p112 = scmp.ne.s32.totalorder %s107, %s109
      %p113 = scmp.eq.s32.totalorder %s26, 0
      %p114 = por %p112, %p113
      %p115 = scmp.ne.s32.totalorder %s107, %s109
      %p116 = scmp.eq.s32.totalorder %s31, 1
      %p117 = por %p115, %p116
      %p118 = scmp.ne.s32.totalorder %s109, %s110
      %p119 = scmp.eq.s32.totalorder %s31, 0
      %p120 = por %p118, %p119
      %p121 = scmp.ne.s32.totalorder %s109, %s110
      %p122 = scmp.eq.s32.totalorder %s32, 1
      %p123 = por %p121, %p122
      %p125 = scmp.ne.s32.totalorder %s110, %s124
      %p126 = scmp.eq.s32.totalorder %s32, 0
      %p127 = por %p125, %p126
      %s129 = sadd.s32 %s128, 1
      %p132 = scmp.eq.s32.totalorder %s26, 1
      %p133 = scmp.ne.s32.totalorder %s128, %s130
      %p134 = scmp.eq.s32.totalorder %s26, 0
      %p135 = por %p133, %p134
      %p136 = scmp.ne.s32.totalorder %s128, %s130
      %p137 = scmp.eq.s32.totalorder %s31, 1
      %p138 = por %p136, %p137
      %p139 = scmp.ne.s32.totalorder %s130, %s131
      %p140 = scmp.eq.s32.totalorder %s31, 0
      %p141 = por %p139, %p140
      %p142 = scmp.ne.s32.totalorder %s130, %s131
      %p143 = scmp.eq.s32.totalorder %s32, 1
      %p144 = por %p142, %p143
      %p146 = scmp.ne.s32.totalorder %s131, %s145
      %p147 = scmp.eq.s32.totalorder %s32, 0
      %p148 = por %p146, %p147
      %s150 = sadd.s32 %s149, 1
      %p153 = scmp.eq.s32.totalorder %s26, 1
      %p154 = scmp.ne.s32.totalorder %s149, %s151
      %p155 = scmp.eq.s32.totalorder %s26, 0
      %p156 = por %p154, %p155
      %p157 = scmp.ne.s32.totalorder %s149, %s151
      %p158 = scmp.eq.s32.totalorder %s31, 1
      %p159 = por %p157, %p158
      %p160 = scmp.ne.s32.totalorder %s151, %s152
      %p161 = scmp.eq.s32.totalorder %s31, 0
      %p162 = por %p160, %p161
      %p163 = scmp.ne.s32.totalorder %s151, %s152
      %p164 = scmp.eq.s32.totalorder %s32, 1
      %p165 = por %p163, %p164
      %p167 = scmp.ne.s32.totalorder %s152, %s166
      %p168 = scmp.eq.s32.totalorder %s32, 0
      %p169 = por %p167, %p168
      %s171 = sadd.s32 %s170, 1
      %p174 = scmp.eq.s32.totalorder %s26, 1
      %p175 = scmp.ne.s32.totalorder %s170, %s172
      %p176 = scmp.eq.s32.totalorder %s26, 0
      %p177 = por %p175, %p176
      %p178 = scmp.ne.s32.totalorder %s170, %s172
      %p179 = scmp.eq.s32.totalorder %s31, 1
      %p180 = por %p178, %p179
      %p181 = scmp.ne.s32.totalorder %s172, %s173
      %p182 = scmp.eq.s32.totalorder %s31, 0
      %p183 = por %p181, %p182
      %p184 = scmp.ne.s32.totalorder %s172, %s173
      %p185 = scmp.eq.s32.totalorder %s32, 1
      %p186 = por %p184, %p185
      %p188 = scmp.ne.s32.totalorder %s173, %s187
      %p189 = scmp.eq.s32.totalorder %s32, 0
      %p190 = por %p188, %p189
      %s192 = sadd.s32 %s191, 1
      %p195 = scmp.eq.s32.totalorder %s26, 1
      %p196 = scmp.ne.s32.totalorder %s191, %s193
      %p197 = scmp.eq.s32.totalorder %s26, 0
      %p198 = por %p196, %p197
      %p199 = scmp.ne.s32.totalorder %s191, %s193
      %p200 = scmp.eq.s32.totalorder %s31, 1
      %p201 = por %p199, %p200
      %p202 = scmp.ne.s32.totalorder %s193, %s194
      %p203 = scmp.eq.s32.totalorder %s31, 0
      %p204 = por %p202, %p203
      %p205 = scmp.ne.s32.totalorder %s193, %s194
      %p206 = scmp.eq.s32.totalorder %s32, 1
      %p207 = por %p205, %p206
      %p209 = scmp.ne.s32.totalorder %s194, %s208
      %p210 = scmp.eq.s32.totalorder %s32, 0
      %p211 = por %p209, %p210
      %s213 = sadd.s32 %s212, 1
      %p216 = scmp.eq.s32.totalorder %s26, 1
      %p217 = scmp.ne.s32.totalorder %s212, %s214
      %p218 = scmp.eq.s32.totalorder %s26, 0
      %p219 = por %p217, %p218
      %p220 = scmp.ne.s32.totalorder %s212, %s214
      %p221 = scmp.eq.s32.totalorder %s31, 1
      %p222 = por %p220, %p221
      %p223 = scmp.ne.s32.totalorder %s214, %s215
      %p224 = scmp.eq.s32.totalorder %s31, 0
      %p225 = por %p223, %p224
      %p226 = scmp.ne.s32.totalorder %s214, %s215
      %p227 = scmp.eq.s32.totalorder %s32, 1
      %p228 = por %p226, %p227
      %p230 = scmp.ne.s32.totalorder %s215, %s229
      %p231 = scmp.eq.s32.totalorder %s32, 0
      %p232 = por %p230, %p231
      %s234 = sadd.s32 %s233, 1
      %p237 = scmp.eq.s32.totalorder %s26, 1
      %p238 = scmp.ne.s32.totalorder %s233, %s235
      %p239 = scmp.eq.s32.totalorder %s26, 0
      %p240 = por %p238, %p239
      %p241 = scmp.ne.s32.totalorder %s233, %s235
      %p242 = scmp.eq.s32.totalorder %s31, 1
      %p243 = por %p241, %p242
      %p244 = scmp.ne.s32.totalorder %s235, %s236
      %p245 = scmp.eq.s32.totalorder %s31, 0
      %p246 = por %p244, %p245
      %p247 = scmp.ne.s32.totalorder %s235, %s236
      %p248 = scmp.eq.s32.totalorder %s32, 1
      %p249 = por %p247, %p248
      %p251 = scmp.ne.s32.totalorder %s236, %s250
      %p252 = scmp.eq.s32.totalorder %s32, 0
      %p253 = por %p251, %p252
      %s255 = sadd.s32 %s254, 1
      %p258 = scmp.eq.s32.totalorder %s26, 1
      %p259 = scmp.ne.s32.totalorder %s254, %s256
      %p260 = scmp.eq.s32.totalorder %s26, 0
      %p261 = por %p259, %p260
      %p262 = scmp.ne.s32.totalorder %s254, %s256
      %p263 = scmp.eq.s32.totalorder %s31, 1
      %p264 = por %p262, %p263
      %p265 = scmp.ne.s32.totalorder %s256, %s257
      %p266 = scmp.eq.s32.totalorder %s31, 0
      %p267 = por %p265, %p266
      %p268 = scmp.ne.s32.totalorder %s256, %s257
      %p269 = scmp.eq.s32.totalorder %s32, 1
      %p270 = por %p268, %p269
      %p272 = scmp.ne.s32.totalorder %s257, %s271
      %p273 = scmp.eq.s32.totalorder %s32, 0
      %p274 = por %p272, %p273
      %s276 = sadd.s32 %s275, 1
      %p279 = scmp.eq.s32.totalorder %s26, 1
      %p280 = scmp.ne.s32.totalorder %s275, %s277
      %p281 = scmp.eq.s32.totalorder %s26, 0
      %p282 = por %p280, %p281
      %p283 = scmp.ne.s32.totalorder %s275, %s277
      %p284 = scmp.eq.s32.totalorder %s31, 1
      %p285 = por %p283, %p284
      %p286 = scmp.ne.s32.totalorder %s277, %s278
      %p287 = scmp.eq.s32.totalorder %s31, 0
      %p288 = por %p286, %p287
      %p289 = scmp.ne.s32.totalorder %s277, %s278
      %p290 = scmp.eq.s32.totalorder %s32, 1
      %p291 = por %p289, %p290
      %p293 = scmp.ne.s32.totalorder %s278, %s292
      %p294 = scmp.eq.s32.totalorder %s32, 0
      %p295 = por %p293, %p294
      %s296 = ssub.s32 %s26, %s33
      %p297 = scmp.eq.s32.totalorder %s296, 0
      %s299 = sadd.s32 %s298, 1
      %s300 = scalar_select %p297, %s298, %s299
      %p303 = pneg %p297
      %p304 = scmp.eq.s32.totalorder %s26, 1
      %p305 = por %p303, %p304
      %p306 = scmp.ne.s32.totalorder %s298, %s301
      %p307 = scmp.eq.s32.totalorder %s26, 0
      %p308 = por %p306, %p307
      %p309 = scmp.ne.s32.totalorder %s298, %s301
      %p310 = scmp.eq.s32.totalorder %s31, 1
      %p311 = por %p309, %p310
      %p312 = scmp.ne.s32.totalorder %s301, %s302
      %p313 = scmp.eq.s32.totalorder %s31, 0
      %p314 = por %p312, %p313
      %p315 = scmp.ne.s32.totalorder %s301, %s302
      %p316 = scmp.eq.s32.totalorder %s32, 1
      %p317 = por %p315, %p316
      %p319 = scmp.ne.s32.totalorder %s302, %s318
      %p320 = scmp.eq.s32.totalorder %s32, 0
      %p321 = por %p319, %p320
      %s322 = ssub.s32 %s26, %s33
      %p323 = scmp.eq.s32.totalorder %s322, 0
      %s325 = sadd.s32 %s324, 1
      %s326 = scalar_select %p323, %s324, %s325
      %p329 = pneg %p323
      %p330 = scmp.eq.s32.totalorder %s26, 1
      %p331 = por %p329, %p330
      %p332 = scmp.ne.s32.totalorder %s324, %s327
      %p333 = scmp.eq.s32.totalorder %s26, 0
      %p334 = por %p332, %p333
      %p335 = scmp.ne.s32.totalorder %s324, %s327
      %p336 = scmp.eq.s32.totalorder %s31, 1
      %p337 = por %p335, %p336
      %p338 = scmp.ne.s32.totalorder %s327, %s328
      %p339 = scmp.eq.s32.totalorder %s31, 0
      %p340 = por %p338, %p339
      %p341 = scmp.ne.s32.totalorder %s327, %s328
      %p342 = scmp.eq.s32.totalorder %s32, 1
      %p343 = por %p341, %p342
      %p345 = scmp.ne.s32.totalorder %s328, %s344
      %p346 = scmp.eq.s32.totalorder %s32, 0
      %p347 = por %p345, %p346
      %p348 = scmp.le.s32.totalorder 1, %s26
      %p349 = scmp.lt.s32.totalorder %s26, 3
      %p350 = pnand %p348, %p349
      %p351 = pneg %p350
      // Predicated region
      $region9: #{tpu_custom_call.1} parent=5 // pred_check
        _
      $region10: #{tpu_custom_call.1} parent=5 // pred_check_branch
        %353 = sbr.rel (%p350) target = $region12
      $region11: #{tpu_custom_call.1} parent=5 // pred_region
        %s354 = ssub.s32 %s26, 1
        // Predicated region
        $region13: #{tpu_custom_call.1} parent=11 // pred_check
          %p355 = pneg %p99
        $region14: #{tpu_custom_call.1} parent=11 // pred_check_branch
          %357 = sbr.rel (%p355) target = $region16
        $region15: #{tpu_custom_call.1} parent=11 // pred_region
          _
        $region16: #{tpu_custom_call.1} parent=11 // pred_fallthru
          _
        // Predicated region
        $region17: #{tpu_custom_call.1} parent=11 // pred_check
          %p358 = pneg %p120
        $region18: #{tpu_custom_call.1} parent=11 // pred_check_branch
          %360 = sbr.rel (%p358) target = $region20
        $region19: #{tpu_custom_call.1} parent=11 // pred_region
          _
        $region20: #{tpu_custom_call.1} parent=11 // pred_fallthru
          _
        // Predicated region
        $region21: #{tpu_custom_call.1} parent=11 // pred_check
          %p361 = pneg %p141
        $region22: #{tpu_custom_call.1} parent=11 // pred_check_branch
          %363 = sbr.rel (%p361) target = $region24
        $region23: #{tpu_custom_call.1} parent=11 // pred_region
          _
        $region24: #{tpu_custom_call.1} parent=11 // pred_fallthru
          _
        // Predicated region
        $region25: #{tpu_custom_call.1} parent=11 // pred_check
          %p364 = pneg %p162
        $region26: #{tpu_custom_call.1} parent=11 // pred_check_branch
          %366 = sbr.rel (%p364) target = $region28
        $region27: #{tpu_custom_call.1} parent=11 // pred_region
          _
        $region28: #{tpu_custom_call.1} parent=11 // pred_fallthru
          _
        // Predicated region
        $region29: #{tpu_custom_call.1} parent=11 // pred_check
          %p367 = pneg %p183
        $region30: #{tpu_custom_call.1} parent=11 // pred_check_branch
          %369 = sbr.rel (%p367) target = $region32
        $region31: #{tpu_custom_call.1} parent=11 // pred_region
          _
        $region32: #{tpu_custom_call.1} parent=11 // pred_fallthru
          _
        // Predicated region
        $region33: #{tpu_custom_call.1} parent=11 // pred_check
          %p370 = pneg %p204
        $region34: #{tpu_custom_call.1} parent=11 // pred_check_branch
          %372 = sbr.rel (%p370) target = $region36
        $region35: #{tpu_custom_call.1} parent=11 // pred_region
          _
        $region36: #{tpu_custom_call.1} parent=11 // pred_fallthru
          _
        // Predicated region
        $region37: #{tpu_custom_call.1} parent=11 // pred_check
          %p373 = pneg %p225
        $region38: #{tpu_custom_call.1} parent=11 // pred_check_branch
          %375 = sbr.rel (%p373) target = $region40
        $region39: #{tpu_custom_call.1} parent=11 // pred_region
          _
        $region40: #{tpu_custom_call.1} parent=11 // pred_fallthru
          _
        // Predicated region
        $region41: #{tpu_custom_call.1} parent=11 // pred_check
          %p376 = pneg %p246
        $region42: #{tpu_custom_call.1} parent=11 // pred_check_branch
          %378 = sbr.rel (%p376) target = $region44
        $region43: #{tpu_custom_call.1} parent=11 // pred_region
          _
        $region44: #{tpu_custom_call.1} parent=11 // pred_fallthru
          _
        // Predicated region
        $region45: #{tpu_custom_call.1} parent=11 // pred_check
          %p379 = pneg %p267
        $region46: #{tpu_custom_call.1} parent=11 // pred_check_branch
          %381 = sbr.rel (%p379) target = $region48
        $region47: #{tpu_custom_call.1} parent=11 // pred_region
          _
        $region48: #{tpu_custom_call.1} parent=11 // pred_fallthru
          _
        // Predicated region
        $region49: #{tpu_custom_call.1} parent=11 // pred_check
          %p382 = pneg %p288
        $region50: #{tpu_custom_call.1} parent=11 // pred_check_branch
          %384 = sbr.rel (%p382) target = $region52
        $region51: #{tpu_custom_call.1} parent=11 // pred_region
          _
        $region52: #{tpu_custom_call.1} parent=11 // pred_fallthru
          _
      $region12: #{tpu_custom_call.1} parent=5 // pred_fallthru
        _
      %p385 = scmp.lt.s32.totalorder %s26, 2
      // Predicated region
      $region53: #{tpu_custom_call.1} parent=5 // pred_check
        %p386 = pneg %p385
      $region54: #{tpu_custom_call.1} parent=5 // pred_check_branch
        %388 = sbr.rel (%p386) target = $region56
      $region55: #{tpu_custom_call.1} parent=5 // pred_region
        // Predicated region
        $region57: #{tpu_custom_call.1} parent=55 // pred_check
          %p389 = pneg %p46
        $region58: #{tpu_custom_call.1} parent=55 // pred_check_branch
          %391 = sbr.rel (%p389) target = $region60
        $region59: #{tpu_custom_call.1} parent=55 // pred_region
          %p392 = scmp.lt.s32.totalorder %s26, 1
          %s393 = scalar_select %p392, %s26, 1
          %s394 = smul.addr %s393, 8
          %s395 = scalar_lea.vmem %s0, %s394
        $region60: #{tpu_custom_call.1} parent=55 // pred_fallthru
          _
        // Predicated region
        $region61: #{tpu_custom_call.1} parent=55 // pred_check
          %p396 = pneg %p72
        $region62: #{tpu_custom_call.1} parent=55 // pred_check_branch
          %398 = sbr.rel (%p396) target = $region64
        $region63: #{tpu_custom_call.1} parent=55 // pred_region
          %p399 = scmp.lt.s32.totalorder %s26, 1
          %s400 = scalar_select %p399, %s26, 1
          %s401 = scalar_lea.vmem %s1, %s400
        $region64: #{tpu_custom_call.1} parent=55 // pred_fallthru
          _
      $region56: #{tpu_custom_call.1} parent=5 // pred_fallthru
        _
      %p402 = scmp.le.s32.totalorder 1, %s26
      %p403 = scmp.lt.s32.totalorder %s26, 3
      %p404 = pnand %p402, %p403
      %p405 = pneg %p404
      // Predicated region
      $region65: #{tpu_custom_call.1} parent=5 // pred_check
        _
      $region66: #{tpu_custom_call.1} parent=5 // pred_check_branch
        %407 = sbr.rel (%p404) target = $region68
      $region67: #{tpu_custom_call.1} parent=5 // pred_region
        %s408 = ssub.s32 %s26, 1
        %p409 = scmp.lt.s32.totalorder %s31, 1
        %s410 = scalar_select %p409, %s31, 1
        %s411 = smul.addr %s410, 8
        %s412 = scalar_lea.vmem %s0, %s411
        %p413 = pneg %p52
        %p414 = pneg %p49
        %p415 = scmp.lt.s32.totalorder %s31, 1
        %s416 = scalar_select %p415, %s31, 1
        %s417 = scalar_lea.vmem %s1, %s416
        %p418 = pneg %p78
        %p419 = pneg %p75
        %p420 = pneg %p99
        %p421 = pneg %p96
        %p422 = pneg %p120
        %p423 = pneg %p117
        %p424 = pneg %p141
        %p425 = pneg %p138
        %p426 = pneg %p162
        %p427 = pneg %p159
        %p428 = pneg %p183
        %p429 = pneg %p180
        %p430 = pneg %p204
        %p431 = pneg %p201
        %p432 = pneg %p225
        %p433 = pneg %p222
        %p434 = pneg %p246
        %p435 = pneg %p243
        %p436 = pneg %p267
        %p437 = pneg %p264
        %p438 = pneg %p288
        %p439 = pneg %p285
        %p440 = pneg %p314
        %p441 = pneg %p311
        %s442 = sand.u32 %s301, 1
        %s443 = scalar_lea.sflag [#allocation3], %s442
        %s444 = sand.u32 %s301, 1
        %s445 = smul.addr %s444, 8
        %s446 = scalar_lea.vmem [#allocation2], %s445
        %p447 = pneg %p340
        %p448 = pneg %p337
        %s449 = sand.u32 %s327, 1
        %s450 = scalar_lea.sflag [#allocation5], %s449
        %s451 = sand.u32 %s327, 1
        %s452 = scalar_lea.vmem [#allocation4], %s451
        %p453 = scmp.lt.s32.totalorder %s31, 1
        %s454 = scalar_select %p453, %s31, 1
        %s455 = smul.addr %s454, 8
        %s456 = scalar_lea.vmem %s0, %s455
        %p457 = scmp.lt.s32.totalorder %s31, 1
        %s458 = scalar_select %p457, %s31, 1
        %s459 = scalar_lea.vmem %s1, %s458
        %v460 = vld [vmem:[%s456] sm:$0xff]
        %v461 = vld [vmem:[%s459] sm:$0x1]
        %v462 = vld [vmem:[%s2] sm:$0xff]
        %v463 = vld [vmem:[%s3] sm:$0xff]
        %465 = vset.pattern.permute.xlu0 0
        %466 = vperm.xlu0 %465, %v463
        %v467 = vpop.permute.xlu0 %466
        %v470 = vlaneseq
        %v471 = vshrl.u32 %v470, 7
        %v472 = vsub.s32 0, %v471
        %v473 = vrot.slane %v461, %v472
        %v475 = vmul.f32 %v467, %v473
        %vm476 = vcmask 64512
        %v478 = vsel %vm476, %v462, 0
        %480 = vmatprep.subr.mxu0 0.0
        %481 = vmatpush1.msra.mxu0 %v460
        %482 = vmatprep.subr.mxu0 0.0
        %483 = vmatpush1.msra.mxu0 0.0
        %484 = vmatprep.subr.mxu0 0.0
        %485 = vmatpush1.msra.mxu0 0.0
        %486 = vmatprep.subr.mxu0 0.0
        %487 = vmatpush1.msra.mxu0 0.0
        %488 = vmatprep.subr.mxu0 0.0
        %489 = vmatpush1.msra.mxu0 0.0
        %490 = vmatprep.subr.mxu0 0.0
        %491 = vmatpush1.msra.mxu0 0.0
        %492 = vmatprep.subr.mxu0 0.0
        %493 = vmatpush1.msra.mxu0 0.0
        %494 = vmatprep.subr.mxu0 0.0
        %495 = vmatpush1.msra.mxu0 0.0
        %496 = vmatprep.subr.mxu0 0.0
        %497 = vmatpush1.msra.mxu0 0.0
        %498 = vmatprep.subr.mxu0 0.0
        %499 = vmatpush1.msra.mxu0 0.0
        %500 = vmatprep.subr.mxu0 0.0
        %501 = vmatpush1.msra.mxu0 0.0
        %502 = vmatprep.subr.mxu0 0.0
        %503 = vmatpush1.msra.mxu0 0.0
        %504 = vmatprep.subr.mxu0 0.0
        %505 = vmatpush1.msra.mxu0 0.0
        %506 = vmatprep.subr.mxu0 0.0
        %507 = vmatpush1.msra.mxu0 0.0
        %508 = vmatprep.subr.mxu0 0.0
        %509 = vmatpush1.msra.mxu0 0.0
        %510 = vmatprep.subr.mxu0 0.0
        %511 = vmatpush1.msra.mxu0 0.0
        %512 = vmatprep.subr.mxu0 0.0
        %513 = vmatpush1.msra.mxu0 0.0
        %514 = vmatprep.subr.mxu0 0.0
        %515 = vmatpush1.msra.mxu0 0.0
        %516 = vmatprep.subr.mxu0 0.0
        %517 = vmatpush1.msra.mxu0 0.0
        %518 = vmatprep.subr.mxu0 0.0
        %519 = vmatpush1.msra.mxu0 0.0
        %520 = vmatprep.subr.mxu0 0.0
        %521 = vmatpush1.msra.mxu0 0.0
        %522 = vmatprep.subr.mxu0 0.0
        %523 = vmatpush1.msra.mxu0 0.0
        %524 = vmatprep.subr.mxu0 0.0
        %525 = vmatpush1.msra.mxu0 0.0
        %526 = vmatprep.subr.mxu0 0.0
        %527 = vmatpush1.msra.mxu0 0.0
        %528 = vmatprep.subr.mxu0 0.0
        %529 = vmatpush1.msra.mxu0 0.0
        %530 = vmatprep.subr.mxu0 0.0
        %531 = vmatpush1.msra.mxu0 0.0
        %532 = vmatprep.subr.mxu0 0.0
        %533 = vmatpush1.msra.mxu0 0.0
        %534 = vmatprep.subr.mxu0 0.0
        %535 = vmatpush1.msra.mxu0 0.0
        %536 = vmatprep.subr.mxu0 0.0
        %537 = vmatpush1.msra.mxu0 0.0
        %538 = vmatprep.subr.mxu0 0.0
        %539 = vmatpush1.msra.mxu0 0.0
        %540 = vmatprep.subr.mxu0 0.0
        %541 = vmatpush1.msra.mxu0 0.0
        %542 = vmatprep.subr.mxu0 0.0
        %543 = vmatpush1.msra.mxu0 0.0
        %544 = vmatprep.mubr.f32.mxu0 0.0
        %545 = vmatmul.mubr.f32.gmra.mrb[0].mxu0 %v478
        %v546 = vpop.f32.mrb[0].mxu0
        %v547 = vadd.f32 %v475, %v546
        %v548 = vpop.f32.mrb[0].mxu0
        %549 = vdwg.mxu0
        %550 = vst [vmem:[%s446] sm:$0xf] %v547
        %v551 = vld [vmem:[%s4] sm:$0xff]
        %v552 = vld [vmem:[%s4 + $0x8] sm:$0xff]
        %v553 = vld [vmem:[%s5] sm:$0xff]
        %v554 = vld [vmem:[%s5 + $0x8] sm:$0xff]
        %556 = vset.pattern.permute.xlu0 0
        %557 = vperm.xlu0 %556, %v553
        %v558 = vpop.permute.xlu0 %557
        %561 = vset.pattern.permute.xlu0 0
        %562 = vperm.xlu0 %561, %v554
        %v563 = vpop.permute.xlu0 %562
        %vm565 = vcmask 31744
        %v567 = vsel %vm565, %v551, 0
        %v570 = vsel %vm565, %v552, 0
        %vm572 = vcmask 1043456
        %v574 = vsel %vm572, %v547, 0
        %576 = vmatprep.subr.mxu0 0.0
        %577 = vmatpush1.msra.mxu0 %v574
        %578 = vmatprep.subr.mxu0 0.0
        %579 = vmatpush1.msra.mxu0 0.0
        %580 = vmatprep.subr.mxu0 0.0
        %581 = vmatpush1.msra.mxu0 0.0
        %582 = vmatprep.subr.mxu0 0.0
        %583 = vmatpush1.msra.mxu0 0.0
        %584 = vmatprep.subr.mxu0 0.0
        %585 = vmatpush1.msra.mxu0 0.0
        %586 = vmatprep.subr.mxu0 0.0
        %587 = vmatpush1.msra.mxu0 0.0
        %588 = vmatprep.subr.mxu0 0.0
        %589 = vmatpush1.msra.mxu0 0.0
        %590 = vmatprep.subr.mxu0 0.0
        %591 = vmatpush1.msra.mxu0 0.0
        %592 = vmatprep.subr.mxu0 0.0
        %593 = vmatpush1.msra.mxu0 0.0
        %594 = vmatprep.subr.mxu0 0.0
        %595 = vmatpush1.msra.mxu0 0.0
        %596 = vmatprep.subr.mxu0 0.0
        %597 = vmatpush1.msra.mxu0 0.0
        %598 = vmatprep.subr.mxu0 0.0
        %599 = vmatpush1.msra.mxu0 0.0
        %600 = vmatprep.subr.mxu0 0.0
        %601 = vmatpush1.msra.mxu0 0.0
        %602 = vmatprep.subr.mxu0 0.0
        %603 = vmatpush1.msra.mxu0 0.0
        %604 = vmatprep.subr.mxu0 0.0
        %605 = vmatpush1.msra.mxu0 0.0
        %606 = vmatprep.subr.mxu0 0.0
        %607 = vmatpush1.msra.mxu0 0.0
        %608 = vmatprep.subr.mxu0 0.0
        %609 = vmatpush1.msra.mxu0 0.0
        %610 = vmatprep.subr.mxu0 0.0
        %611 = vmatpush1.msra.mxu0 0.0
        %612 = vmatprep.subr.mxu0 0.0
        %613 = vmatpush1.msra.mxu0 0.0
        %614 = vmatprep.subr.mxu0 0.0
        %615 = vmatpush1.msra.mxu0 0.0
        %616 = vmatprep.subr.mxu0 0.0
        %617 = vmatpush1.msra.mxu0 0.0
        %618 = vmatprep.subr.mxu0 0.0
        %619 = vmatpush1.msra.mxu0 0.0
        %620 = vmatprep.subr.mxu0 0.0
        %621 = vmatpush1.msra.mxu0 0.0
        %622 = vmatprep.subr.mxu0 0.0
        %623 = vmatpush1.msra.mxu0 0.0
        %624 = vmatprep.subr.mxu0 0.0
        %625 = vmatpush1.msra.mxu0 0.0
        %626 = vmatprep.subr.mxu0 0.0
        %627 = vmatpush1.msra.mxu0 0.0
        %628 = vmatprep.subr.mxu0 0.0
        %629 = vmatpush1.msra.mxu0 0.0
        %630 = vmatprep.subr.mxu0 0.0
        %631 = vmatpush1.msra.mxu0 0.0
        %632 = vmatprep.subr.mxu0 0.0
        %633 = vmatpush1.msra.mxu0 0.0
        %634 = vmatprep.subr.mxu0 0.0
        %635 = vmatpush1.msra.mxu0 0.0
        %636 = vmatprep.subr.mxu0 0.0
        %637 = vmatpush1.msra.mxu0 0.0
        %638 = vmatprep.subr.mxu0 0.0
        %639 = vmatpush1.msra.mxu0 0.0
        %640 = vmatprep.mubr.f32.mxu0 0.0
        %641 = vmatmul.mubr.f32.gmra.mrb[0].mxu0 %v567
        %v642 = vpop.f32.mrb[0].mxu0
        %v643 = vadd.f32 %v558, %v642
        %v644 = vpop.f32.mrb[0].mxu0
        %645 = vmatprep.mubr.f32.mxu0 0.0
        %646 = vmatmul.mubr.f32.gmra.mrb[0].mxu0 %v570
        %v647 = vpop.f32.mrb[0].mxu0
        %v648 = vadd.f32 %v563, %v647
        %v649 = vpop.f32.mrb[0].mxu0
        %650 = vdwg.mxu0
        %v651 = vmul.f32 %v643, %v473
        %v652 = vmul.f32 %v648, %v473
        %653 = vrot.lane.b32.xlu0 %v651, 1
        %v654 = vpop.permute.xlu0 %653
        %655 = vrot.lane.b32.xlu0 %v652, 1
        %v656 = vpop.permute.xlu0 %655
        %657 = vrot.lane.b32.xlu0 %v651, 127
        %v658 = vpop.permute.xlu0 %657
        %659 = vrot.lane.b32.xlu0 %v652, 127
        %v660 = vpop.permute.xlu0 %659
        %v661 = vld [vmem:[%s6] sm:$0xff]
        %v662 = vld [vmem:[%s6 + $0x8] sm:$0xff]
        %v663 = vld [vmem:[%s6 + $0x10] sm:$0xff]
        %v664 = vld [vmem:[%s6 + $0x18] sm:$0xff]
        %v665 = vld [vmem:[%s7] sm:$0xff]
        %v666 = vld [vmem:[%s7 + $0x8] sm:$0xff]
        %v667 = vld [vmem:[%s7 + $0x10] sm:$0xff]
        %v668 = vld [vmem:[%s7 + $0x18] sm:$0xff]
        %670 = vset.pattern.permute.xlu0 0
        %671 = vperm.xlu0 %670, %v665
        %v672 = vpop.permute.xlu0 %671
        %675 = vset.pattern.permute.xlu0 0
        %676 = vperm.xlu0 %675, %v666
        %v677 = vpop.permute.xlu0 %676
        %680 = vset.pattern.permute.xlu0 0
        %681 = vperm.xlu0 %680, %v667
        %v682 = vpop.permute.xlu0 %681
        %685 = vset.pattern.permute.xlu0 0
        %686 = vperm.xlu0 %685, %v668
        %v687 = vpop.permute.xlu0 %686
        %vm689 = vcmask 392192
        %v691 = vsel %vm689, %v661, 0
        %v694 = vsel %vm689, %v662, 0
        %v697 = vsel %vm689, %v663, 0
        %v700 = vsel %vm689, %v664, 0
        %702 = vmatprep.subr.mxu0 0.0
        %703 = vmatpush1.msra.mxu0 %v654
        %704 = vmatprep.subr.mxu0 0.0
        %705 = vmatpush1.msra.mxu0 %v656
        %706 = vmatprep.subr.mxu0 0.0
        %707 = vmatpush1.msra.mxu0 %v651
        %708 = vmatprep.subr.mxu0 0.0
        %709 = vmatpush1.msra.mxu0 %v652
        %710 = vmatprep.subr.mxu0 0.0
        %711 = vmatpush1.msra.mxu0 %v658
        %712 = vmatprep.subr.mxu0 0.0
        %713 = vmatpush1.msra.mxu0 %v660
        %714 = vmatprep.subr.mxu0 0.0
        %715 = vmatpush1.msra.mxu0 0.0
        %716 = vmatprep.subr.mxu0 0.0
        %717 = vmatpush1.msra.mxu0 0.0
        %718 = vmatprep.subr.mxu0 0.0
        %719 = vmatpush1.msra.mxu0 0.0
        %720 = vmatprep.subr.mxu0 0.0
        %721 = vmatpush1.msra.mxu0 0.0
        %722 = vmatprep.subr.mxu0 0.0
        %723 = vmatpush1.msra.mxu0 0.0
        %724 = vmatprep.subr.mxu0 0.0
        %725 = vmatpush1.msra.mxu0 0.0
        %726 = vmatprep.subr.mxu0 0.0
        %727 = vmatpush1.msra.mxu0 0.0
        %728 = vmatprep.subr.mxu0 0.0
        %729 = vmatpush1.msra.mxu0 0.0
        %730 = vmatprep.subr.mxu0 0.0
        %731 = vmatpush1.msra.mxu0 0.0
        %732 = vmatprep.subr.mxu0 0.0
        %733 = vmatpush1.msra.mxu0 0.0
        %734 = vmatprep.subr.mxu0 0.0
        %735 = vmatpush1.msra.mxu0 0.0
        %736 = vmatprep.subr.mxu0 0.0
        %737 = vmatpush1.msra.mxu0 0.0
        %738 = vmatprep.subr.mxu0 0.0
        %739 = vmatpush1.msra.mxu0 0.0
        %740 = vmatprep.subr.mxu0 0.0
        %741 = vmatpush1.msra.mxu0 0.0
        %742 = vmatprep.subr.mxu0 0.0
        %743 = vmatpush1.msra.mxu0 0.0
        %744 = vmatprep.subr.mxu0 0.0
        %745 = vmatpush1.msra.mxu0 0.0
        %746 = vmatprep.subr.mxu0 0.0
        %747 = vmatpush1.msra.mxu0 0.0
        %748 = vmatprep.subr.mxu0 0.0
        %749 = vmatpush1.msra.mxu0 0.0
        %750 = vmatprep.subr.mxu0 0.0
        %751 = vmatpush1.msra.mxu0 0.0
        %752 = vmatprep.subr.mxu0 0.0
        %753 = vmatpush1.msra.mxu0 0.0
        %754 = vmatprep.subr.mxu0 0.0
        %755 = vmatpush1.msra.mxu0 0.0
        %756 = vmatprep.subr.mxu0 0.0
        %757 = vmatpush1.msra.mxu0 0.0
        %758 = vmatprep.subr.mxu0 0.0
        %759 = vmatpush1.msra.mxu0 0.0
        %760 = vmatprep.subr.mxu0 0.0
        %761 = vmatpush1.msra.mxu0 0.0
        %762 = vmatprep.subr.mxu0 0.0
        %763 = vmatpush1.msra.mxu0 0.0
        %764 = vmatprep.subr.mxu0 0.0
        %765 = vmatpush1.msra.mxu0 0.0
        %766 = vmatprep.mubr.f32.mxu0 0.0
        %767 = vmatmul.mubr.f32.gmra.mrb[0].mxu0 %v691
        %v768 = vpop.f32.mrb[0].mxu0
        %v769 = vadd.f32 %v672, %v768
        %v770 = vpop.f32.mrb[0].mxu0
        %771 = vmatprep.mubr.f32.mxu0 0.0
        %772 = vmatmul.mubr.f32.gmra.mrb[0].mxu0 %v694
        %v773 = vpop.f32.mrb[0].mxu0
        %v774 = vadd.f32 %v677, %v773
        %v775 = vpop.f32.mrb[0].mxu0
        %776 = vmatprep.mubr.f32.mxu0 0.0
        %777 = vmatmul.mubr.f32.gmra.mrb[0].mxu0 %v697
        %v778 = vpop.f32.mrb[0].mxu0
        %v779 = vadd.f32 %v682, %v778
        %v780 = vpop.f32.mrb[0].mxu0
        %781 = vmatprep.mubr.f32.mxu0 0.0
        %782 = vmatmul.mubr.f32.gmra.mrb[0].mxu0 %v700
        %v783 = vpop.f32.mrb[0].mxu0
        %v784 = vadd.f32 %v687, %v783
        %v785 = vpop.f32.mrb[0].mxu0
        %786 = vdwg.mxu0
        %v787 = vtanh.pop %v769
        %v788 = vtanh.pop %v774
        %v789 = vxor.u32 %v779, 2147483648
        %v790 = vxor.u32 %v784, 2147483648
        %v791 = vmul.f32 %v789, 1.442695
        %v792 = vpow.pop %v791
        %v793 = vmul.f32 %v790, 1.442695
        %v794 = vpow.pop %v793
        %v795 = vadd.f32 %v792, 1.0
        %v796 = vadd.f32 %v794, 1.0
        %v797 = vrcp.pop %v795
        %v798 = vmul.f32 1.0, %v797
        %v799 = vrcp.pop %v796
        %v800 = vmul.f32 1.0, %v799
        %v801 = vmul.f32 %v787, %v798
        %v802 = vmul.f32 %v788, %v800
        %v803 = vld [vmem:[%s8] sm:$0xff]
        %v804 = vld [vmem:[%s8 + $0x8] sm:$0xff]
        %v805 = vld [vmem:[%s8 + $0x10] sm:$0xff]
        %v806 = vld [vmem:[%s8 + $0x18] sm:$0xff]
        %v807 = vld [vmem:[%s9] sm:$0xff]
        %v808 = vld [vmem:[%s9 + $0x8] sm:$0xff]
        %v809 = vld [vmem:[%s9 + $0x10] sm:$0xff]
        %v810 = vld [vmem:[%s9 + $0x18] sm:$0xff]
        %812 = vset.pattern.permute.xlu0 0
        %813 = vperm.xlu0 %812, %v807
        %v814 = vpop.permute.xlu0 %813
        %817 = vset.pattern.permute.xlu0 0
        %818 = vperm.xlu0 %817, %v808
        %v819 = vpop.permute.xlu0 %818
        %822 = vset.pattern.permute.xlu0 0
        %823 = vperm.xlu0 %822, %v809
        %v824 = vpop.permute.xlu0 %823
        %827 = vset.pattern.permute.xlu0 0
        %828 = vperm.xlu0 %827, %v810
        %v829 = vpop.permute.xlu0 %828
        %vm831 = vcmask 130048
        %v833 = vsel %vm831, %v803, 0
        %v836 = vsel %vm831, %v804, 0
        %v839 = vsel %vm831, %v805, 0
        %v842 = vsel %vm831, %v806, 0
        %844 = vmatprep.subr.mxu0 0.0
        %845 = vmatpush1.msra.mxu0 %v801
        %846 = vmatprep.subr.mxu0 0.0
        %847 = vmatpush1.msra.mxu0 %v802
        %848 = vmatprep.subr.mxu0 0.0
        %849 = vmatpush1.msra.mxu0 0.0
        %850 = vmatprep.subr.mxu0 0.0
        %851 = vmatpush1.msra.mxu0 0.0
        %852 = vmatprep.subr.mxu0 0.0
        %853 = vmatpush1.msra.mxu0 0.0
        %854 = vmatprep.subr.mxu0 0.0
        %855 = vmatpush1.msra.mxu0 0.0
        %856 = vmatprep.subr.mxu0 0.0
        %857 = vmatpush1.msra.mxu0 0.0
        %858 = vmatprep.subr.mxu0 0.0
        %859 = vmatpush1.msra.mxu0 0.0
        %860 = vmatprep.subr.mxu0 0.0
        %861 = vmatpush1.msra.mxu0 0.0
        %862 = vmatprep.subr.mxu0 0.0
        %863 = vmatpush1.msra.mxu0 0.0
        %864 = vmatprep.subr.mxu0 0.0
        %865 = vmatpush1.msra.mxu0 0.0
        %866 = vmatprep.subr.mxu0 0.0
        %867 = vmatpush1.msra.mxu0 0.0
        %868 = vmatprep.subr.mxu0 0.0
        %869 = vmatpush1.msra.mxu0 0.0
        %870 = vmatprep.subr.mxu0 0.0
        %871 = vmatpush1.msra.mxu0 0.0
        %872 = vmatprep.subr.mxu0 0.0
        %873 = vmatpush1.msra.mxu0 0.0
        %874 = vmatprep.subr.mxu0 0.0
        %875 = vmatpush1.msra.mxu0 0.0
        %876 = vmatprep.subr.mxu0 0.0
        %877 = vmatpush1.msra.mxu0 0.0
        %878 = vmatprep.subr.mxu0 0.0
        %879 = vmatpush1.msra.mxu0 0.0
        %880 = vmatprep.subr.mxu0 0.0
        %881 = vmatpush1.msra.mxu0 0.0
        %882 = vmatprep.subr.mxu0 0.0
        %883 = vmatpush1.msra.mxu0 0.0
        %884 = vmatprep.subr.mxu0 0.0
        %885 = vmatpush1.msra.mxu0 0.0
        %886 = vmatprep.subr.mxu0 0.0
        %887 = vmatpush1.msra.mxu0 0.0
        %888 = vmatprep.subr.mxu0 0.0
        %889 = vmatpush1.msra.mxu0 0.0
        %890 = vmatprep.subr.mxu0 0.0
        %891 = vmatpush1.msra.mxu0 0.0
        %892 = vmatprep.subr.mxu0 0.0
        %893 = vmatpush1.msra.mxu0 0.0
        %894 = vmatprep.subr.mxu0 0.0
        %895 = vmatpush1.msra.mxu0 0.0
        %896 = vmatprep.subr.mxu0 0.0
        %897 = vmatpush1.msra.mxu0 0.0
        %898 = vmatprep.subr.mxu0 0.0
        %899 = vmatpush1.msra.mxu0 0.0
        %900 = vmatprep.subr.mxu0 0.0
        %901 = vmatpush1.msra.mxu0 0.0
        %902 = vmatprep.subr.mxu0 0.0
        %903 = vmatpush1.msra.mxu0 0.0
        %904 = vmatprep.subr.mxu0 0.0
        %905 = vmatpush1.msra.mxu0 0.0
        %906 = vmatprep.subr.mxu0 0.0
        %907 = vmatpush1.msra.mxu0 0.0
        %908 = vmatprep.mubr.f32.mxu0 0.0
        %909 = vmatmul.mubr.f32.gmra.mrb[0].mxu0 %v833
        %v910 = vpop.f32.mrb[0].mxu0
        %v911 = vadd.f32 %v814, %v910
        %v912 = vpop.f32.mrb[0].mxu0
        %913 = vmatprep.mubr.f32.mxu0 0.0
        %914 = vmatmul.mubr.f32.gmra.mrb[0].mxu0 %v836
        %v915 = vpop.f32.mrb[0].mxu0
        %v916 = vadd.f32 %v819, %v915
        %v917 = vpop.f32.mrb[0].mxu0
        %918 = vmatprep.mubr.f32.mxu0 0.0
        %919 = vmatmul.mubr.f32.gmra.mrb[0].mxu0 %v839
        %v920 = vpop.f32.mrb[0].mxu0
        %v921 = vadd.f32 %v824, %v920
        %v922 = vpop.f32.mrb[0].mxu0
        %923 = vmatprep.mubr.f32.mxu0 0.0
        %924 = vmatmul.mubr.f32.gmra.mrb[0].mxu0 %v842
        %v925 = vpop.f32.mrb[0].mxu0
        %v926 = vadd.f32 %v829, %v925
        %v927 = vpop.f32.mrb[0].mxu0
        %928 = vdwg.mxu0
        %v929 = vadd.f32 %v651, %v911
        %v930 = vadd.f32 %v652, %v916
        %v931 = vmul.f32 %v929, %v473
        %v932 = vmul.f32 %v930, %v473
        %v933 = vadd.f32 %v921, 0.0
        %v934 = vadd.f32 %v926, 0.0
        %935 = vrot.lane.b32.xlu0 %v931, 2
        %v936 = vpop.permute.xlu0 %935
        %937 = vrot.lane.b32.xlu0 %v932, 2
        %v938 = vpop.permute.xlu0 %937
        %939 = vrot.lane.b32.xlu0 %v931, 126
        %v940 = vpop.permute.xlu0 %939
        %941 = vrot.lane.b32.xlu0 %v932, 126
        %v942 = vpop.permute.xlu0 %941
        %s943 = scalar_lea.vmem %s6, 32
        %v944 = vld [vmem:[%s943] sm:$0xff]
        %v945 = vld [vmem:[%s943 + $0x8] sm:$0xff]
        %v946 = vld [vmem:[%s943 + $0x10] sm:$0xff]
        %v947 = vld [vmem:[%s943 + $0x18] sm:$0xff]
        %s948 = scalar_lea.vmem %s7, 32
        %v949 = vld [vmem:[%s948] sm:$0xff]
        %v950 = vld [vmem:[%s948 + $0x8] sm:$0xff]
        %v951 = vld [vmem:[%s948 + $0x10] sm:$0xff]
        %v952 = vld [vmem:[%s948 + $0x18] sm:$0xff]
        %954 = vset.pattern.permute.xlu0 0
        %955 = vperm.xlu0 %954, %v949
        %v956 = vpop.permute.xlu0 %955
        %959 = vset.pattern.permute.xlu0 0
        %960 = vperm.xlu0 %959, %v950
        %v961 = vpop.permute.xlu0 %960
        %964 = vset.pattern.permute.xlu0 0
        %965 = vperm.xlu0 %964, %v951
        %v966 = vpop.permute.xlu0 %965
        %969 = vset.pattern.permute.xlu0 0
        %970 = vperm.xlu0 %969, %v952
        %v971 = vpop.permute.xlu0 %970
        %v974 = vsel %vm689, %v944, 0
        %v977 = vsel %vm689, %v945, 0
        %v980 = vsel %vm689, %v946, 0
        %v983 = vsel %vm689, %v947, 0
        %985 = vmatprep.subr.mxu0 0.0
        %986 = vmatpush1.msra.mxu0 %v936
        %987 = vmatprep.subr.mxu0 0.0
        %988 = vmatpush1.msra.mxu0 %v938
        %989 = vmatprep.subr.mxu0 0.0
        %990 = vmatpush1.msra.mxu0 %v931
        %991 = vmatprep.subr.mxu0 0.0
        %992 = vmatpush1.msra.mxu0 %v932
        %993 = vmatprep.subr.mxu0 0.0
        %994 = vmatpush1.msra.mxu0 %v940
        %995 = vmatprep.subr.mxu0 0.0
        %996 = vmatpush1.msra.mxu0 %v942
        %997 = vmatprep.subr.mxu0 0.0
        %998 = vmatpush1.msra.mxu0 0.0
        %999 = vmatprep.subr.mxu0 0.0
        %1000 = vmatpush1.msra.mxu0 0.0
        %1001 = vmatprep.subr.mxu0 0.0
        %1002 = vmatpush1.msra.mxu0 0.0
        %1003 = vmatprep.subr.mxu0 0.0
        %1004 = vmatpush1.msra.mxu0 0.0
        %1005 = vmatprep.subr.mxu0 0.0
        %1006 = vmatpush1.msra.mxu0 0.0
        %1007 = vmatprep.subr.mxu0 0.0
        %1008 = vmatpush1.msra.mxu0 0.0
        %1009 = vmatprep.subr.mxu0 0.0
        %1010 = vmatpush1.msra.mxu0 0.0
        %1011 = vmatprep.subr.mxu0 0.0
        %1012 = vmatpush1.msra.mxu0 0.0
        %1013 = vmatprep.subr.mxu0 0.0
        %1014 = vmatpush1.msra.mxu0 0.0
        %1015 = vmatprep.subr.mxu0 0.0
        %1016 = vmatpush1.msra.mxu0 0.0
        %1017 = vmatprep.subr.mxu0 0.0
        %1018 = vmatpush1.msra.mxu0 0.0
        %1019 = vmatprep.subr.mxu0 0.0
        %1020 = vmatpush1.msra.mxu0 0.0
        %1021 = vmatprep.subr.mxu0 0.0
        %1022 = vmatpush1.msra.mxu0 0.0
        %1023 = vmatprep.subr.mxu0 0.0
        %1024 = vmatpush1.msra.mxu0 0.0
        %1025 = vmatprep.subr.mxu0 0.0
        %1026 = vmatpush1.msra.mxu0 0.0
        %1027 = vmatprep.subr.mxu0 0.0
        %1028 = vmatpush1.msra.mxu0 0.0
        %1029 = vmatprep.subr.mxu0 0.0
        %1030 = vmatpush1.msra.mxu0 0.0
        %1031 = vmatprep.subr.mxu0 0.0
        %1032 = vmatpush1.msra.mxu0 0.0
        %1033 = vmatprep.subr.mxu0 0.0
        %1034 = vmatpush1.msra.mxu0 0.0
        %1035 = vmatprep.subr.mxu0 0.0
        %1036 = vmatpush1.msra.mxu0 0.0
        %1037 = vmatprep.subr.mxu0 0.0
        %1038 = vmatpush1.msra.mxu0 0.0
        %1039 = vmatprep.subr.mxu0 0.0
        %1040 = vmatpush1.msra.mxu0 0.0
        %1041 = vmatprep.subr.mxu0 0.0
        %1042 = vmatpush1.msra.mxu0 0.0
        %1043 = vmatprep.subr.mxu0 0.0
        %1044 = vmatpush1.msra.mxu0 0.0
        %1045 = vmatprep.subr.mxu0 0.0
        %1046 = vmatpush1.msra.mxu0 0.0
        %1047 = vmatprep.subr.mxu0 0.0
        %1048 = vmatpush1.msra.mxu0 0.0
        %1049 = vmatprep.mubr.f32.mxu0 0.0
        %1050 = vmatmul.mubr.f32.gmra.mrb[0].mxu0 %v974
        %v1051 = vpop.f32.mrb[0].mxu0
        %v1052 = vadd.f32 %v956, %v1051
        %v1053 = vpop.f32.mrb[0].mxu0
        %1054 = vmatprep.mubr.f32.mxu0 0.0
        %1055 = vmatmul.mubr.f32.gmra.mrb[0].mxu0 %v977
        %v1056 = vpop.f32.mrb[0].mxu0
        %v1057 = vadd.f32 %v961, %v1056
        %v1058 = vpop.f32.mrb[0].mxu0
        %1059 = vmatprep.mubr.f32.mxu0 0.0
        %1060 = vmatmul.mubr.f32.gmra.mrb[0].mxu0 %v980
        %v1061 = vpop.f32.mrb[0].mxu0
        %v1062 = vadd.f32 %v966, %v1061
        %v1063 = vpop.f32.mrb[0].mxu0
        %1064 = vmatprep.mubr.f32.mxu0 0.0
        %1065 = vmatmul.mubr.f32.gmra.mrb[0].mxu0 %v983
        %v1066 = vpop.f32.mrb[0].mxu0
        %v1067 = vadd.f32 %v971, %v1066
        %v1068 = vpop.f32.mrb[0].mxu0
        %1069 = vdwg.mxu0
        %v1070 = vtanh.pop %v1052
        %v1071 = vtanh.pop %v1057
        %v1072 = vxor.u32 %v1062, 2147483648
        %v1073 = vxor.u32 %v1067, 2147483648
        %v1074 = vmul.f32 %v1072, 1.442695
        %v1075 = vpow.pop %v1074
        %v1076 = vmul.f32 %v1073, 1.442695
        %v1077 = vpow.pop %v1076
        %v1078 = vadd.f32 %v1075, 1.0
        %v1079 = vadd.f32 %v1077, 1.0
        %v1080 = vrcp.pop %v1078
        %v1081 = vmul.f32 1.0, %v1080
        %v1082 = vrcp.pop %v1079
        %v1083 = vmul.f32 1.0, %v1082
        %v1084 = vmul.f32 %v1070, %v1081
        %v1085 = vmul.f32 %v1071, %v1083
        %s1086 = scalar_lea.vmem %s8, 32
        %v1087 = vld [vmem:[%s1086] sm:$0xff]
        %v1088 = vld [vmem:[%s1086 + $0x8] sm:$0xff]
        %v1089 = vld [vmem:[%s1086 + $0x10] sm:$0xff]
        %v1090 = vld [vmem:[%s1086 + $0x18] sm:$0xff]
        %s1091 = scalar_lea.vmem %s9, 32
        %v1092 = vld [vmem:[%s1091] sm:$0xff]
        %v1093 = vld [vmem:[%s1091 + $0x8] sm:$0xff]
        %v1094 = vld [vmem:[%s1091 + $0x10] sm:$0xff]
        %v1095 = vld [vmem:[%s1091 + $0x18] sm:$0xff]
        %1097 = vset.pattern.permute.xlu0 0
        %1098 = vperm.xlu0 %1097, %v1092
        %v1099 = vpop.permute.xlu0 %1098
        %1101 = vset.pattern.permute.xlu0 0
        %1102 = vperm.xlu0 %1101, %v1093
        %v1103 = vpop.permute.xlu0 %1102
        %1105 = vset.pattern.permute.xlu0 0
        %1106 = vperm.xlu0 %1105, %v1094
        %v1107 = vpop.permute.xlu0 %1106
        %1110 = vset.pattern.permute.xlu0 0
        %1111 = vperm.xlu0 %1110, %v1095
        %v1112 = vpop.permute.xlu0 %1111
        %v1115 = vsel %vm831, %v1087, 0
        %v1118 = vsel %vm831, %v1088, 0
        %v1121 = vsel %vm831, %v1089, 0
        %v1124 = vsel %vm831, %v1090, 0
        %1126 = vmatprep.subr.mxu0 0.0
        %1127 = vmatpush1.msra.mxu0 %v1084
        %1128 = vmatprep.subr.mxu0 0.0
        %1129 = vmatpush1.msra.mxu0 %v1085
        %1130 = vmatprep.subr.mxu0 0.0
        %1131 = vmatpush1.msra.mxu0 0.0
        %1132 = vmatprep.subr.mxu0 0.0
        %1133 = vmatpush1.msra.mxu0 0.0
        %1134 = vmatprep.subr.mxu0 0.0
        %1135 = vmatpush1.msra.mxu0 0.0
        %1136 = vmatprep.subr.mxu0 0.0
        %1137 = vmatpush1.msra.mxu0 0.0
        %1138 = vmatprep.subr.mxu0 0.0
        %1139 = vmatpush1.msra.mxu0 0.0
        %1140 = vmatprep.subr.mxu0 0.0
        %1141 = vmatpush1.msra.mxu0 0.0
        %1142 = vmatprep.subr.mxu0 0.0
        %1143 = vmatpush1.msra.mxu0 0.0
        %1144 = vmatprep.subr.mxu0 0.0
        %1145 = vmatpush1.msra.mxu0 0.0
        %1146 = vmatprep.subr.mxu0 0.0
        %1147 = vmatpush1.msra.mxu0 0.0
        %1148 = vmatprep.subr.mxu0 0.0
        %1149 = vmatpush1.msra.mxu0 0.0
        %1150 = vmatprep.subr.mxu0 0.0
        %1151 = vmatpush1.msra.mxu0 0.0
        %1152 = vmatprep.subr.mxu0 0.0
        %1153 = vmatpush1.msra.mxu0 0.0
        %1154 = vmatprep.subr.mxu0 0.0
        %1155 = vmatpush1.msra.mxu0 0.0
        %1156 = vmatprep.subr.mxu0 0.0
        %1157 = vmatpush1.msra.mxu0 0.0
        %1158 = vmatprep.subr.mxu0 0.0
        %1159 = vmatpush1.msra.mxu0 0.0
        %1160 = vmatprep.subr.mxu0 0.0
        %1161 = vmatpush1.msra.mxu0 0.0
        %1162 = vmatprep.subr.mxu0 0.0
        %1163 = vmatpush1.msra.mxu0 0.0
        %1164 = vmatprep.subr.mxu0 0.0
        %1165 = vmatpush1.msra.mxu0 0.0
        %1166 = vmatprep.subr.mxu0 0.0
        %1167 = vmatpush1.msra.mxu0 0.0
        %1168 = vmatprep.subr.mxu0 0.0
        %1169 = vmatpush1.msra.mxu0 0.0
        %1170 = vmatprep.subr.mxu0 0.0
        %1171 = vmatpush1.msra.mxu0 0.0
        %1172 = vmatprep.subr.mxu0 0.0
        %1173 = vmatpush1.msra.mxu0 0.0
        %1174 = vmatprep.subr.mxu0 0.0
        %1175 = vmatpush1.msra.mxu0 0.0
        %1176 = vmatprep.subr.mxu0 0.0
        %1177 = vmatpush1.msra.mxu0 0.0
        %1178 = vmatprep.subr.mxu0 0.0
        %1179 = vmatpush1.msra.mxu0 0.0
        %1180 = vmatprep.subr.mxu0 0.0
        %1181 = vmatpush1.msra.mxu0 0.0
        %1182 = vmatprep.subr.mxu0 0.0
        %1183 = vmatpush1.msra.mxu0 0.0
        %1184 = vmatprep.subr.mxu0 0.0
        %1185 = vmatpush1.msra.mxu0 0.0
        %1186 = vmatprep.subr.mxu0 0.0
        %1187 = vmatpush1.msra.mxu0 0.0
        %1188 = vmatprep.subr.mxu0 0.0
        %1189 = vmatpush1.msra.mxu0 0.0
        %1190 = vmatprep.mubr.f32.mxu0 0.0
        %1191 = vmatmul.mubr.f32.gmra.mrb[0].mxu0 %v1115
        %v1192 = vpop.f32.mrb[0].mxu0
        %v1193 = vpop.f32.mrb[0].mxu0
        %1194 = vmatprep.mubr.f32.mxu0 0.0
        %1195 = vmatmul.mubr.f32.gmra.mrb[0].mxu0 %v1118
        %v1196 = vpop.f32.mrb[0].mxu0
        %v1197 = vpop.f32.mrb[0].mxu0
        %1198 = vmatprep.mubr.f32.mxu0 0.0
        %1199 = vmatmul.mubr.f32.gmra.mrb[0].mxu0 %v1121
        %v1200 = vpop.f32.mrb[0].mxu0
        %v1201 = vadd.f32 %v1107, %v1200
        %v1202 = vpop.f32.mrb[0].mxu0
        %1203 = vmatprep.mubr.f32.mxu0 0.0
        %1204 = vmatmul.mubr.f32.gmra.mrb[0].mxu0 %v1124
        %v1205 = vpop.f32.mrb[0].mxu0
        %v1206 = vadd.f32 %v1112, %v1205
        %v1207 = vpop.f32.mrb[0].mxu0
        %1208 = vdwg.mxu0
        %v1209 = vadd.f32 %v933, %v1201
        %v1210 = vadd.f32 %v934, %v1206
        %v1211 = vmul.f32 %v1209, %v473
        %v1212 = vmul.f32 %v1210, %v473
        %v1213 = vld [vmem:[%s10] sm:$0xff]
        %v1214 = vld [vmem:[%s11] sm:$0xff]
        %1216 = vset.pattern.permute.xlu0 0
        %1217 = vperm.xlu0 %1216, %v1214
        %v1218 = vpop.permute.xlu0 %1217
        %v1221 = vsel %vm831, %v1213, 0
        %1223 = vmatprep.subr.mxu0 0.0
        %1224 = vmatpush1.msra.mxu0 %v1211
        %1225 = vmatprep.subr.mxu0 0.0
        %1226 = vmatpush1.msra.mxu0 %v1212
        %1227 = vmatprep.subr.mxu0 0.0
        %1228 = vmatpush1.msra.mxu0 0.0
        %1229 = vmatprep.subr.mxu0 0.0
        %1230 = vmatpush1.msra.mxu0 0.0
        %1231 = vmatprep.subr.mxu0 0.0
        %1232 = vmatpush1.msra.mxu0 0.0
        %1233 = vmatprep.subr.mxu0 0.0
        %1234 = vmatpush1.msra.mxu0 0.0
        %1235 = vmatprep.subr.mxu0 0.0
        %1236 = vmatpush1.msra.mxu0 0.0
        %1237 = vmatprep.subr.mxu0 0.0
        %1238 = vmatpush1.msra.mxu0 0.0
        %1239 = vmatprep.subr.mxu0 0.0
        %1240 = vmatpush1.msra.mxu0 0.0
        %1241 = vmatprep.subr.mxu0 0.0
        %1242 = vmatpush1.msra.mxu0 0.0
        %1243 = vmatprep.subr.mxu0 0.0
        %1244 = vmatpush1.msra.mxu0 0.0
        %1245 = vmatprep.subr.mxu0 0.0
        %1246 = vmatpush1.msra.mxu0 0.0
        %1247 = vmatprep.subr.mxu0 0.0
        %1248 = vmatpush1.msra.mxu0 0.0
        %1249 = vmatprep.subr.mxu0 0.0
        %1250 = vmatpush1.msra.mxu0 0.0
        %1251 = vmatprep.subr.mxu0 0.0
        %1252 = vmatpush1.msra.mxu0 0.0
        %1253 = vmatprep.subr.mxu0 0.0
        %1254 = vmatpush1.msra.mxu0 0.0
        %1255 = vmatprep.subr.mxu0 0.0
        %1256 = vmatpush1.msra.mxu0 0.0
        %1257 = vmatprep.subr.mxu0 0.0
        %1258 = vmatpush1.msra.mxu0 0.0
        %1259 = vmatprep.subr.mxu0 0.0
        %1260 = vmatpush1.msra.mxu0 0.0
        %1261 = vmatprep.subr.mxu0 0.0
        %1262 = vmatpush1.msra.mxu0 0.0
        %1263 = vmatprep.subr.mxu0 0.0
        %1264 = vmatpush1.msra.mxu0 0.0
        %1265 = vmatprep.subr.mxu0 0.0
        %1266 = vmatpush1.msra.mxu0 0.0
        %1267 = vmatprep.subr.mxu0 0.0
        %1268 = vmatpush1.msra.mxu0 0.0
        %1269 = vmatprep.subr.mxu0 0.0
        %1270 = vmatpush1.msra.mxu0 0.0
        %1271 = vmatprep.subr.mxu0 0.0
        %1272 = vmatpush1.msra.mxu0 0.0
        %1273 = vmatprep.subr.mxu0 0.0
        %1274 = vmatpush1.msra.mxu0 0.0
        %1275 = vmatprep.subr.mxu0 0.0
        %1276 = vmatpush1.msra.mxu0 0.0
        %1277 = vmatprep.subr.mxu0 0.0
        %1278 = vmatpush1.msra.mxu0 0.0
        %1279 = vmatprep.subr.mxu0 0.0
        %1280 = vmatpush1.msra.mxu0 0.0
        %1281 = vmatprep.subr.mxu0 0.0
        %1282 = vmatpush1.msra.mxu0 0.0
        %1283 = vmatprep.subr.mxu0 0.0
        %1284 = vmatpush1.msra.mxu0 0.0
        %1285 = vmatprep.subr.mxu0 0.0
        %1286 = vmatpush1.msra.mxu0 0.0
        %1287 = vmatprep.mubr.f32.mxu0 0.0
        %1288 = vmatmul.mubr.f32.gmra.mrb[0].mxu0 %v1221
        %v1289 = vpop.f32.mrb[0].mxu0
        %v1290 = vadd.f32 %v1218, %v1289
        %v1291 = vpop.f32.mrb[0].mxu0
        %1292 = vdwg.mxu0
        %v1293 = vmul.f32 %v1290, 1.442695
        %v1294 = vpow.pop %v1293
        %v1295 = vmul.f32 %v1294, %v547
        %v1297 = vrot.slane %v1295, 4
        %v1299 = vadd.f32 %v1290, %v1297
        %v1300 = vmul.f32 %v1299, %v473
        %1301 = vst [vmem:[%s446 + $0x4] sm:$0xf] %v1300
        %v1302 = vmul.f32 %v1290, %v473
        %v1304 = vrot.slane %v1302, 4
        %v1306 = vsel %vm572, %v1304, 0.0
        %1307 = vadd.xlane.f32.xlu0 %v1306
        %v1308 = vpop.xlane.xlu0 %1307
        %v1309 = vrot.slane %v1308, 4
        %v1310 = vadd.f32 %v1308, %v1309
        %v1311 = vrot.slane %v1310, 2
        %v1312 = vadd.f32 %v1310, %v1311
        %v1313 = vrot.slane %v1312, 1
        %v1314 = vadd.f32 %v1312, %v1313
        %s1315 = vtos %v1314
        %v1316 = vstv %s1315
        %1317 = vst [vmem:[%s452] sm:$0x1] %v1316
        %s1318 = sand.u32 %s301, 1
        %s1319 = scalar_lea.sflag [#allocation3], %s1318
        %s1320 = sand.u32 %s301, 1
        %s1321 = smul.addr %s1320, 8
        %s1322 = scalar_lea.vmem [#allocation2], %s1321
        %s1323 = sand.u32 %s327, 1
        %s1324 = scalar_lea.sflag [#allocation5], %s1323
        %s1325 = sand.u32 %s327, 1
        %s1326 = scalar_lea.vmem [#allocation4], %s1325
        // Predicated region
        $region69: #{tpu_custom_call.1} parent=67 // pred_check
          %p1327 = pneg %p311
        $region70: #{tpu_custom_call.1} parent=67 // pred_check_branch
          %1329 = sbr.rel (%p1327) target = $region72
        $region71: #{tpu_custom_call.1} parent=67 // pred_region
          %s1331 = ssub.s32 128, 128
          %1332 = vsyncadd %s1319, %s1331
          %s1333 = smul.addr %s31, 128
          %s1334 = scalar_lea.hbm %s12, %s1333
          %s1336 = sshll.u32 %s1322, 4
          %s1337 = int_to_ptr.vmem [resolvable:$true] %s1336
          %1339 = dma.vmem_to_hbm [thread:$0]  %s1337, 128, %s1334, %s1319
        $region72: #{tpu_custom_call.1} parent=67 // pred_fallthru
          _
        // Predicated region
        $region73: #{tpu_custom_call.1} parent=67 // pred_check
          %p1340 = pneg %p337
        $region74: #{tpu_custom_call.1} parent=67 // pred_check_branch
          %1342 = sbr.rel (%p1340) target = $region76
        $region75: #{tpu_custom_call.1} parent=67 // pred_region
          %s1344 = ssub.s32 16, 16
          %1345 = vsyncadd %s1324, %s1344
          %s1346 = smul.addr %s31, 16
          %s1347 = scalar_lea.hbm %s13, %s1346
          %s1349 = sshll.u32 %s1326, 4
          %s1350 = int_to_ptr.vmem [resolvable:$true] %s1349
          %1352 = dma.vmem_to_hbm [thread:$0]  %s1350, 16, %s1347, %s1324
        $region76: #{tpu_custom_call.1} parent=67 // pred_fallthru
          _
      $region68: #{tpu_custom_call.1} parent=5 // pred_fallthru
        _
      %p1353 = scmp.le.s32.totalorder 2, %s26
      // Predicated region
      $region77: #{tpu_custom_call.1} parent=5 // pred_check
        %p1354 = pneg %p1353
      $region78: #{tpu_custom_call.1} parent=5 // pred_check_branch
        %1356 = sbr.rel (%p1354) target = $region80
      $region79: #{tpu_custom_call.1} parent=5 // pred_region
        %s1357 = ssub.s32 %s26, 2
        // Predicated region
        $region81: #{tpu_custom_call.1} parent=79 // pred_check
          %p1358 = pneg %p317
        $region82: #{tpu_custom_call.1} parent=79 // pred_check_branch
          %1360 = sbr.rel (%p1358) target = $region84
        $region83: #{tpu_custom_call.1} parent=79 // pred_region
          %s1361 = sand.u32 %s302, 1
          %s1362 = scalar_lea.sflag [#allocation3], %s1361
          %s1363 = sand.u32 %s302, 1
          %s1364 = smul.addr %s1363, 8
          %s1365 = scalar_lea.vmem [#allocation2], %s1364
          %1366 = dma.done %s1362, 128
        $region84: #{tpu_custom_call.1} parent=79 // pred_fallthru
          _
        // Predicated region
        $region85: #{tpu_custom_call.1} parent=79 // pred_check
          %p1367 = pneg %p343
        $region86: #{tpu_custom_call.1} parent=79 // pred_check_branch
          %1369 = sbr.rel (%p1367) target = $region88
        $region87: #{tpu_custom_call.1} parent=79 // pred_region
          %s1370 = sand.u32 %s328, 1
          %s1371 = scalar_lea.sflag [#allocation5], %s1370
          %s1372 = sand.u32 %s328, 1
          %s1373 = scalar_lea.vmem [#allocation4], %s1372
          %1374 = dma.done %s1371, 16
        $region88: #{tpu_custom_call.1} parent=79 // pred_fallthru
          _
      $region80: #{tpu_custom_call.1} parent=5 // pred_fallthru
        _
    $region6: #{tpu_custom_call.1} parent=1 // loop_footer
      %s30 = sadd.s32 1, %s26
    $region7: #{tpu_custom_call.1} parent=1 // loop_footer_branch
      %25 = sbr.rel target = $region3
    $region8: #{tpu_custom_call.1} parent=1 // loop_exit
      _
    %1375 = vsyncpa [#allocation3], 1
    %s1376 = scalar_lea.sflag [#allocation3], 1
    %1377 = vsyncpa %s1376, 1
    %1378 = vsyncpa [#allocation5], 1
    %s1379 = scalar_lea.sflag [#allocation5], 1
    %1380 = vsyncpa %s1379, 1

</llo_original>
